<compile_context>
chip_gen: v7x
topology: tpu7x:2x2x1
jax: 0.10.0
libtpu: 0.0.40
codegen_flags: <defaults>
</compile_context>

<pallas_src>
import jax
import jax.numpy as jnp
from jax import lax
from jax.experimental import pallas as pl
from jax.experimental.pallas import tpu as pltpu


# -----------------------------------------------------------------------------
# Fused kernel: attention block + classifier head + masked BCE / acc / count.
#   grid = (bz // block_b,) ; each step handles block_b batch elements and
#   writes one lane-dense (8,128) slab of partial sums (grid stays "parallel").
# -----------------------------------------------------------------------------
def fused_kernel(h_ref, kp_ref, vp_ref, kmask_ref, y_ref,
                 wqkv_ref, wo_ref, g_ref, beta_ref, cw_ref, cb_ref,
                 out_ref):
    Bb, T, H = h_ref.shape
    Cp = kp_ref.shape[1]

    h_bf = h_ref[...]                                    # (Bb, T, H) bf16
    h2d = h_bf.reshape(Bb * T, H)                        # batch folded into M

    # ---- fused QKV projection: one bf16 MXU matmul, f32 accumulation -------
    qkv = jnp.dot(h2d, wqkv_ref[...], preferred_element_type=jnp.float32)
    scale = jnp.float32(1.0 / (H ** 0.5))                # fold 1/sqrt(H) into q
    q = (qkv[:, :H] * scale).reshape(Bb, T, H).astype(jnp.bfloat16)
    k_new = qkv[:, H:2 * H].reshape(Bb, T, H).astype(jnp.bfloat16)
    v_new = qkv[:, 2 * H:].reshape(Bb, T, H).astype(jnp.bfloat16)

    # ---- two-piece masked-softmax attention (no KV concat scratch) ----------
    kmask = kmask_ref[...]                               # (Bb, 1, Cp+T) int32
    km_cmd = kmask[:, :, :Cp] > 0                        # (Bb, 1, Cp)
    km_txt = kmask[:, :, Cp:] > 0                        # (Bb, 1, T)

    s_cmd = jnp.einsum('bqh,bkh->bqk', q, kp_ref[...],
                       preferred_element_type=jnp.float32)   # (Bb, T, Cp)
    s_txt = jnp.einsum('bqh,bkh->bqk', q, k_new,
                       preferred_element_type=jnp.float32)   # (Bb, T, T)

    row = lax.broadcasted_iota(jnp.int32, (1, T, T), 1)
    col = lax.broadcasted_iota(jnp.int32, (1, T, T), 2)
    neg = jnp.float32(-1e9)
    s_cmd = jnp.where(km_cmd, s_cmd, neg)                # cmd keys are all "past"
    s_txt = jnp.where(km_txt & (col <= row), s_txt, neg)  # causal + key padding

    m = jnp.maximum(jnp.max(s_cmd, axis=-1, keepdims=True),
                    jnp.max(s_txt, axis=-1, keepdims=True))
    p_cmd = jnp.exp(s_cmd - m)
    p_txt = jnp.exp(s_txt - m)
    denom = (jnp.sum(p_cmd, axis=-1, keepdims=True)
             + jnp.sum(p_txt, axis=-1, keepdims=True))
    ctx = (jnp.einsum('bqk,bkh->bqh', p_cmd.astype(jnp.bfloat16), vp_ref[...],
                      preferred_element_type=jnp.float32)
           + jnp.einsum('bqk,bkh->bqh', p_txt.astype(jnp.bfloat16), v_new,
                        preferred_element_type=jnp.float32))
    ctx = ctx * pl.reciprocal(denom, approx=True)        # EUP reciprocal

    # ---- output projection + residual + final LayerNorm (f32 VPU math) -----
    attn = jnp.dot(ctx.reshape(Bb * T, H).astype(jnp.bfloat16), wo_ref[...],
                   preferred_element_type=jnp.float32)   # (Bb*T, H)
    h2 = h2d.astype(jnp.float32) + attn
    mu = jnp.mean(h2, axis=-1, keepdims=True)
    var = jnp.mean((h2 - mu) ** 2, axis=-1, keepdims=True)
    ln = (h2 - mu) * lax.rsqrt(var + 1e-5) * g_ref[...] + beta_ref[...]

    # ---- classifier head + masked BCEWithLogits / accuracy / count ----------
    # TODO(synk): nn.Dropout(classifier_dropout) treated as identity (eval).
    ln3 = ln.reshape(Bb, T, H)
    logits = jnp.sum(ln3 * cw_ref[...], axis=-1) + cb_ref[...]   # (Bb, T)
    y = y_ref[...].reshape(Bb, 1)                        # labels, broadcast over T
    maskf = (kmask[:, 0, Cp:] > 0).astype(jnp.float32)   # == text_attention_mask

    x = logits
    # numerically-stable BCEWithLogits, elementwise
    bce = jnp.maximum(x, 0.0) - x * y + jnp.log(1.0 + jnp.exp(-jnp.abs(x)))
    pred = (x >= 0.5).astype(jnp.float32)                # spec thresholds RAW logits
    correct = (pred == y).astype(jnp.float32)

    bce_s = jnp.sum(bce * maskf, keepdims=True)          # (1, 1)
    cor_s = jnp.sum(correct * maskf, keepdims=True)
    cnt_s = jnp.sum(maskf, keepdims=True)

    # single lane-dense (8,128) slab: [bce, correct, count] in row 0, lanes 0..2
    sub = lax.broadcasted_iota(jnp.int32, (8, 128), 0)
    lane = lax.broadcasted_iota(jnp.int32, (8, 128), 1)
    r0 = sub == 0
    slab = (jnp.where(r0 & (lane == 0), bce_s, 0.0)
            + jnp.where(r0 & (lane == 1), cor_s, 0.0)
            + jnp.where(r0 & (lane == 2), cnt_s, 0.0))
    out_ref[0] = slab


# -----------------------------------------------------------------------------
# VMEM footprint accounting ((8,128)/(16,128)-tile-padded) and block_b policy.
# -----------------------------------------------------------------------------
def _padded_tile_bytes(shape, dtype):
    item = jnp.dtype(dtype).itemsize
    shape = (1,) * max(0, 2 - len(shape)) + tuple(int(d) for d in shape)
    sub = 8 * max(1, 4 // item)                          # f32/i32: 8, bf16: 16
    lead = 1
    for d in shape[:-2]:
        lead *= d
    rows = -(-shape[-2] // sub) * sub
    cols = -(-shape[-1] // 128) * 128
    return lead * rows * cols * item


def _kernel_vmem_bytes(block_b, T, H, Cp, KT):
    bf2, f4, i4 = jnp.bfloat16, jnp.float32, jnp.int32
    per_step = (_padded_tile_bytes((block_b, T, H), bf2)          # h
                + 2 * _padded_tile_bytes((block_b, Cp, H), bf2)   # K/V past
                + _padded_tile_bytes((block_b, 1, KT), i4)        # key mask
                + _padded_tile_bytes((block_b, 1, 1), f4)         # labels
                + _padded_tile_bytes((1, 8, 128), f4))            # packed output
    weights = (_padded_tile_bytes((H, 3 * H), bf2)
               + _padded_tile_bytes((H, H), bf2)
               + 3 * _padded_tile_bytes((1, H), f4)
               + _padded_tile_bytes((1, 1), f4))
    # rough bound on live f32 intermediates (qkv, scores, probs, ctx, ln)
    live = 4 * block_b * T * (6 * H + 2 * (Cp + T))
    return 2 * (per_step + weights) + live               # double-buffered blocks


# -----------------------------------------------------------------------------
# Wrapper: embedding lookup / mask prep in plain JAX, hot path in Pallas.
# -----------------------------------------------------------------------------
def freeze_command_alignment_forward(params, cmd_past, text_ids,
                                     cmd_attention_mask, text_attention_mask,
                                     prefix_lengths, text_lengths, labels,
                                     block_b=None):
    # change_position_ids=False -> prefix/text lengths unused in the forward.
    del prefix_lengths, text_lengths
    kpast, vpast = cmd_past
    bz, T = text_ids.shape
    C = cmd_attention_mask.shape[1]
    H = params["wqkv"].shape[0]

    # Pad cached cmd length to a multiple of 16 (bf16 sublane tile). Padded
    # keys carry mask 0 and are never attended to.
    Cp = ((C + 15) // 16) * 16
    kp = jnp.pad(kpast, ((0, 0), (0, Cp - C), (0, 0))).astype(jnp.bfloat16)
    vp = jnp.pad(vpast, ((0, 0), (0, Cp - C), (0, 0))).astype(jnp.bfloat16)
    cmask_p = jnp.pad(cmd_attention_mask.astype(jnp.int32),
                      ((0, 0), (0, Cp - C)))
    KT = Cp + T

    # embedding lookup (glue); GPT-2 default position ids = past_len + arange
    pos = C + jnp.arange(T)
    h = (jnp.take(params["wte"], text_ids, axis=0)
         + params["wpe"][pos][None, :, :]).astype(jnp.bfloat16)     # (bz, T, H)

    # [cmd ; text] key mask == torch.cat([cmd_mask, text_mask], dim=1) (+ pad).
    # Its text slice doubles as the in-kernel loss mask (no separate DMA).
    kmask = jnp.concatenate(
        [cmask_p, text_attention_mask.astype(jnp.int32)], axis=1)[:, None, :]

    # per-batch labels; broadcast over T inside the kernel
    y = labels.astype(jnp.float32).reshape(bz, 1, 1)

    wqkv = params["wqkv"].astype(jnp.bfloat16)
    wo = params["wo"].astype(jnp.bfloat16)

    # ---- generation-aware VMEM budget & block_b selection -------------------
    try:
        info = pltpu.get_tpu_info()
        vmem_cap = int(getattr(info, "vmem_capacity_bytes", 64 << 20))
    except Exception:
        vmem_cap = 64 << 20                              # v7x-conservative
    budget = max(vmem_cap - (12 << 20), 8 << 20)         # compiler headroom

    if block_b is None:
        divisors = [d for d in range(bz, 0, -1) if bz % d == 0]
        fitting = [d for d in divisors
                   if _kernel_vmem_bytes(d, T, H, Cp, KT) <= budget]
        if not fitting:
            fitting = [1]
        # keep >=2 grid steps so the 2nd TensorCore (v7x megacore) has work
        multi = [d for d in fitting if bz // d >= 2]
        block_b = multi[0] if multi else fitting[0]
    assert bz % block_b == 0, "batch must be divisible by block_b"
    nb = bz // block_b

    vmem_limit = int(min(budget,
                         max(2 * _kernel_vmem_bytes(block_b, T, H, Cp, KT),
                             16 << 20)))

    grid_spec = pltpu.PrefetchScalarGridSpec(
        num_scalar_prefetch=0,
        grid=(nb,),
        in_specs=[
            pl.BlockSpec((block_b, T, H), lambda b: (b, 0, 0)),    # h (bf16)
            pl.BlockSpec((block_b, Cp, H), lambda b: (b, 0, 0)),   # K past
            pl.BlockSpec((block_b, Cp, H), lambda b: (b, 0, 0)),   # V past
            pl.BlockSpec((block_b, 1, KT), lambda b: (b, 0, 0)),   # key mask
            pl.BlockSpec((block_b, 1, 1), lambda b: (b, 0, 0)),    # labels
            pl.BlockSpec((H, 3 * H), lambda b: (0, 0)),            # Wqkv
            pl.BlockSpec((H, H), lambda b: (0, 0)),                # Wo
            pl.BlockSpec((1, H), lambda b: (0, 0)),                # ln gamma
            pl.BlockSpec((1, H), lambda b: (0, 0)),                # ln beta
            pl.BlockSpec((1, H), lambda b: (0, 0)),                # cls weight
            pl.BlockSpec((1, 1), lambda b: (0, 0)),                # cls bias
        ],
        out_specs=pl.BlockSpec((1, 8, 128), lambda b: (b, 0, 0)),  # packed partials
    )

    partials = pl.pallas_call(
        fused_kernel,
        out_shape=jax.ShapeDtypeStruct((nb, 8, 128), jnp.float32),
        grid_spec=grid_spec,
        compiler_params=pltpu.CompilerParams(
            dimension_semantics=("parallel",),
            vmem_limit_bytes=vmem_limit),
    )(h, kp, vp, kmask, y, wqkv, wo,
      params["ln_g"], params["ln_b"],
      params["cls_w"], params["cls_b"].reshape(1, 1))

    # tiny finalization (nb lane-dense rows) keeps the grid axis parallel.
    tot = jnp.sum(partials, axis=0)                      # (8, 128)
    nf = tot[0, 2]
    loss = tot[0, 0] / nf
    acc = tot[0, 1] / nf
    n = nf.astype(jnp.int32)
    return loss, acc, n


# -----------------------------------------------------------------------------
# Deterministic parameter / input construction and a single run.
# -----------------------------------------------------------------------------
def init_params(key, vocab, max_pos, hidden):
    ks = jax.random.split(key, 6)
    s = 0.02
    return {
        "wte": s * jax.random.normal(ks[0], (vocab, hidden), jnp.float32),
        "wpe": s * jax.random.normal(ks[1], (max_pos, hidden), jnp.float32),
        "wqkv": s * jax.random.normal(ks[2], (hidden, 3 * hidden), jnp.float32),
        "wo": s * jax.random.normal(ks[3], (hidden, hidden), jnp.float32),
        "ln_g": jnp.ones((1, hidden), jnp.float32),
        "ln_b": jnp.zeros((1, hidden), jnp.float32),
        "cls_w": s * jax.random.normal(ks[4], (1, hidden), jnp.float32),  # Linear(H,1).weight
        "cls_b": jnp.zeros((1,), jnp.float32),                            # Linear(H,1).bias
    }


if __name__ == "__main__":
    # small shapes; H=128 keeps lane slices of the fused QKV matmul tile-aligned
    BZ, CMD_LEN, TEXT_LEN, HIDDEN, VOCAB = 2, 6, 8, 128, 64

    root = jax.random.PRNGKey(0)
    k_par, k_ids, k_kp, k_vp = jax.random.split(root, 4)

    params = init_params(k_par, VOCAB, CMD_LEN + TEXT_LEN, HIDDEN)

    text_ids = jax.random.randint(k_ids, (BZ, TEXT_LEN), 0, VOCAB, jnp.int32)
    # cmd_past: cached (key, value) from the command prefix (single layer/head)
    cmd_past = (
        0.1 * jax.random.normal(k_kp, (BZ, CMD_LEN, HIDDEN), jnp.float32),
        0.1 * jax.random.normal(k_vp, (BZ, CMD_LEN, HIDDEN), jnp.float32),
    )
    cmd_attention_mask = jnp.array([[1, 1, 1, 1, 1, 1],
                                    [1, 1, 1, 1, 1, 0]], jnp.int32)
    text_attention_mask = jnp.array([[1, 1, 1, 1, 1, 1, 1, 1],
                                     [1, 1, 1, 1, 1, 1, 0, 0]], jnp.int32)
    prefix_lengths = jnp.array([6, 5], jnp.int32)
    text_lengths = jnp.array([8, 6], jnp.int32)
    labels = jnp.array([1, 0], jnp.int32)

    loss, acc, n = freeze_command_alignment_forward(
        params, cmd_past, text_ids, cmd_attention_mask, text_attention_mask,
        prefix_lengths, text_lengths, labels)

    loss = jax.block_until_ready(loss)
    acc = jax.block_until_ready(acc)
    n = jax.block_until_ready(n)

    assert jnp.isfinite(loss) and jnp.isfinite(acc)
    assert int(n) == int(text_attention_mask.sum())
    assert 0.0 <= float(acc) <= 1.0

    print("KERNEL_OK")
</pallas_src>

<mosaic_0001>
module attributes {stable_mosaic.version = 11 : i64} {
  func.func @fused_kernel(%arg0: i32, %arg1: memref<1x8x128xbf16, #tpu.memory_space<vmem>>, %arg2: memref<1x16x128xbf16, #tpu.memory_space<vmem>>, %arg3: memref<1x16x128xbf16, #tpu.memory_space<vmem>>, %arg4: memref<1x1x24xi32, #tpu.memory_space<vmem>>, %arg5: memref<1x1x1xf32, #tpu.memory_space<vmem>>, %arg6: memref<128x384xbf16, #tpu.memory_space<vmem>>, %arg7: memref<128x128xbf16, #tpu.memory_space<vmem>>, %arg8: memref<1x128xf32, #tpu.memory_space<vmem>>, %arg9: memref<1x128xf32, #tpu.memory_space<vmem>>, %arg10: memref<1x128xf32, #tpu.memory_space<vmem>>, %arg11: memref<1x1xf32, #tpu.memory_space<vmem>>, %arg12: memref<1x8x128xf32, #tpu.memory_space<vmem>>) attributes {dimension_semantics = [#tpu.dimension_semantics<parallel>], iteration_bounds = array<i64: 2>, scalar_prefetch = 0 : i64, scratch_operands = 0 : i64, tpu.core_type = #tpu.core_type<tc>, window_params = [{transform_indices = @transform_0, window_bounds = array<i64: 1, 8, 128>}, {transform_indices = @transform_1, window_bounds = array<i64: 1, 16, 128>}, {transform_indices = @transform_2, window_bounds = array<i64: 1, 16, 128>}, {transform_indices = @transform_3, window_bounds = array<i64: 1, 1, 24>}, {transform_indices = @transform_4, window_bounds = array<i64: 1, 1, 1>}, {pipeline_mode = #tpu.pipeline_mode<synchronous>, transform_indices = @transform_5, window_bounds = array<i64: 128, 384>}, {pipeline_mode = #tpu.pipeline_mode<synchronous>, transform_indices = @transform_6, window_bounds = array<i64: 128, 128>}, {pipeline_mode = #tpu.pipeline_mode<synchronous>, transform_indices = @transform_7, window_bounds = array<i64: 1, 128>}, {pipeline_mode = #tpu.pipeline_mode<synchronous>, transform_indices = @transform_8, window_bounds = array<i64: 1, 128>}, {pipeline_mode = #tpu.pipeline_mode<synchronous>, transform_indices = @transform_9, window_bounds = array<i64: 1, 128>}, {pipeline_mode = #tpu.pipeline_mode<synchronous>, transform_indices = @transform_10, window_bounds = array<i64: 1, 1>}, {transform_indices = @transform_11, window_bounds = array<i64: 1, 8, 128>}]} {
    %c0 = arith.constant 0 : index
    %c0_0 = arith.constant 0 : index
    %c0_1 = arith.constant 0 : index
    %0 = vector.load %arg1[%c0, %c0_0, %c0_1] : memref<1x8x128xbf16, #tpu.memory_space<vmem>>, vector<1x8x128xbf16>
    %1 = vector.shape_cast %0 : vector<1x8x128xbf16> to vector<8x128xbf16>
    %c0_2 = arith.constant 0 : index
    %c0_3 = arith.constant 0 : index
    %2 = vector.load %arg6[%c0_2, %c0_3] : memref<128x384xbf16, #tpu.memory_space<vmem>>, vector<128x384xbf16>
    %cst = arith.constant dense<0.000000e+00> : vector<8x384xf32>
    %3 = tpu.matmul %1, %2, %cst {dimension_numbers = #tpu.dot_dimension_numbers<[1], [0], [0], [1], [0, 0, 1, 1], [], []>} : vector<8x128xbf16>, vector<128x384xbf16>, vector<8x384xf32> -> vector<8x384xf32>
    %4 = vector.extract_strided_slice %3 {offsets = [0, 0], sizes = [8, 128], strides = [1, 1]} : vector<8x384xf32> to vector<8x128xf32>
    %cst_4 = arith.constant 0.0883883461 : f32
    %5 = vector.broadcast %cst_4 : f32 to vector<8x128xf32>
    %6 = arith.mulf %4, %5 : vector<8x128xf32>
    %7 = vector.shape_cast %6 : vector<8x128xf32> to vector<1x8x128xf32>
    %8 = arith.truncf %7 : vector<1x8x128xf32> to vector<1x8x128xbf16>
    %9 = vector.extract_strided_slice %3 {offsets = [0, 128], sizes = [8, 128], strides = [1, 1]} : vector<8x384xf32> to vector<8x128xf32>
    %10 = vector.shape_cast %9 : vector<8x128xf32> to vector<1x8x128xf32>
    %11 = arith.truncf %10 : vector<1x8x128xf32> to vector<1x8x128xbf16>
    %12 = vector.extract_strided_slice %3 {offsets = [0, 256], sizes = [8, 128], strides = [1, 1]} : vector<8x384xf32> to vector<8x128xf32>
    %13 = vector.shape_cast %12 : vector<8x128xf32> to vector<1x8x128xf32>
    %14 = arith.truncf %13 : vector<1x8x128xf32> to vector<1x8x128xbf16>
    %c0_5 = arith.constant 0 : index
    %c0_6 = arith.constant 0 : index
    %c0_7 = arith.constant 0 : index
    %15 = vector.load %arg4[%c0_5, %c0_6, %c0_7] : memref<1x1x24xi32, #tpu.memory_space<vmem>>, vector<1x1x24xi32>
    %16 = vector.extract_strided_slice %15 {offsets = [0, 0, 0], sizes = [1, 1, 16], strides = [1, 1, 1]} : vector<1x1x24xi32> to vector<1x1x16xi32>
    %c0_i32 = arith.constant 0 : i32
    %17 = vector.broadcast %c0_i32 : i32 to vector<1x1x16xi32>
    %18 = arith.cmpi sgt, %16, %17 : vector<1x1x16xi32>
    %19 = vector.extract_strided_slice %15 {offsets = [0, 0, 16], sizes = [1, 1, 8], strides = [1, 1, 1]} : vector<1x1x24xi32> to vector<1x1x8xi32>
    %c0_i32_8 = arith.constant 0 : i32
    %20 = vector.broadcast %c0_i32_8 : i32 to vector<1x1x8xi32>
    %21 = arith.cmpi sgt, %19, %20 : vector<1x1x8xi32>
    %c0_9 = arith.constant 0 : index
    %c0_10 = arith.constant 0 : index
    %c0_11 = arith.constant 0 : index
    %22 = vector.load %arg2[%c0_9, %c0_10, %c0_11] : memref<1x16x128xbf16, #tpu.memory_space<vmem>>, vector<1x16x128xbf16>
    "tpu.trace_start"() <{level = 10 : i32, message = "bqh,bkh->bqk"}> : () -> ()
    %cst_12 = arith.constant dense<0.000000e+00> : vector<1x8x16xf32>
    %23 = tpu.matmul %8, %22, %cst_12 {dimension_numbers = #tpu.dot_dimension_numbers<[2], [2], [1], [1], [0, 0, 0, 1, 1, 1], [0], [0]>} : vector<1x8x128xbf16>, vector<1x16x128xbf16>, vector<1x8x16xf32> -> vector<1x8x16xf32>
    %cst_13 = arith.constant dense<0.000000e+00> : vector<1x8x8xf32>
    %24 = tpu.matmul %8, %11, %cst_13 {dimension_numbers = #tpu.dot_dimension_numbers<[2], [2], [1], [1], [0, 0, 0, 1, 1, 1], [0], [0]>} : vector<1x8x128xbf16>, vector<1x8x128xbf16>, vector<1x8x8xf32> -> vector<1x8x8xf32>
    "tpu.trace_stop"() : () -> ()
    %25 = tpu.iota {dimensions = array<i32: 1>} : vector<1x8x8xi32>
    %26 = tpu.iota {dimensions = array<i32: 2>} : vector<1x8x8xi32>
    %cst_14 = arith.constant -1.000000e+09 : f32
    %27 = vector.shape_cast %18 : vector<1x1x16xi1> to vector<1x1x16xi1>
    %28 = vector.broadcast %27 : vector<1x1x16xi1> to vector<1x8x16xi1>
    %29 = vector.broadcast %cst_14 : f32 to vector<1x8x16xf32>
    %30 = arith.select %28, %23, %29 : vector<1x8x16xi1>, vector<1x8x16xf32>
    %31 = arith.cmpi sle, %26, %25 : vector<1x8x8xi32>
    %32 = vector.broadcast %21 : vector<1x1x8xi1> to vector<1x8x8xi1>
    %33 = arith.andi %32, %31 : vector<1x8x8xi1>
    %cst_15 = arith.constant -1.000000e+09 : f32
    %34 = vector.broadcast %cst_15 : f32 to vector<1x8x8xf32>
    %35 = arith.select %33, %24, %34 : vector<1x8x8xi1>, vector<1x8x8xf32>
    %cst_16 = arith.constant dense<0xFF800000> : vector<1x8xf32>
    %36 = vector.multi_reduction <maximumf>, %30, %cst_16 [2] : vector<1x8x16xf32> to vector<1x8xf32>
    %37 = vector.shape_cast %36 : vector<1x8xf32> to vector<1x8x1xf32>
    %cst_17 = arith.constant dense<0xFF800000> : vector<1x8xf32>
    %38 = vector.multi_reduction <maximumf>, %35, %cst_17 [2] : vector<1x8x8xf32> to vector<1x8xf32>
    %39 = vector.shape_cast %38 : vector<1x8xf32> to vector<1x8x1xf32>
    %40 = arith.maximumf %37, %39 : vector<1x8x1xf32>
    %41 = vector.broadcast %40 : vector<1x8x1xf32> to vector<1x8x16xf32>
    %42 = arith.subf %30, %41 : vector<1x8x16xf32>
    %43 = math.exp %42 : vector<1x8x16xf32>
    %44 = vector.broadcast %40 : vector<1x8x1xf32> to vector<1x8x8xf32>
    %45 = arith.subf %35, %44 : vector<1x8x8xf32>
    %46 = math.exp %45 : vector<1x8x8xf32>
    %cst_18 = arith.constant dense<0.000000e+00> : vector<1x8xf32>
    %47 = vector.multi_reduction <add>, %43, %cst_18 [2] : vector<1x8x16xf32> to vector<1x8xf32>
    %48 = vector.shape_cast %47 : vector<1x8xf32> to vector<1x8x1xf32>
    %cst_19 = arith.constant dense<0.000000e+00> : vector<1x8xf32>
    %49 = vector.multi_reduction <add>, %46, %cst_19 [2] : vector<1x8x8xf32> to vector<1x8xf32>
    %50 = vector.shape_cast %49 : vector<1x8xf32> to vector<1x8x1xf32>
    %51 = arith.addf %48, %50 : vector<1x8x1xf32>
    %52 = arith.truncf %43 : vector<1x8x16xf32> to vector<1x8x16xbf16>
    %c0_20 = arith.constant 0 : index
    %c0_21 = arith.constant 0 : index
    %c0_22 = arith.constant 0 : index
    %53 = vector.load %arg3[%c0_20, %c0_21, %c0_22] : memref<1x16x128xbf16, #tpu.memory_space<vmem>>, vector<1x16x128xbf16>
    "tpu.trace_start"() <{level = 10 : i32, message = "bqk,bkh->bqh"}> : () -> ()
    %cst_23 = arith.constant dense<0.000000e+00> : vector<1x8x128xf32>
    %54 = tpu.matmul %52, %53, %cst_23 {dimension_numbers = #tpu.dot_dimension_numbers<[2], [1], [1], [2], [0, 0, 0, 1, 1, 2], [0], [0]>} : vector<1x8x16xbf16>, vector<1x16x128xbf16>, vector<1x8x128xf32> -> vector<1x8x128xf32>
    "tpu.trace_stop"() : () -> ()
    %55 = arith.truncf %46 : vector<1x8x8xf32> to vector<1x8x8xbf16>
    "tpu.trace_start"() <{level = 10 : i32, message = "bqk,bkh->bqh"}> : () -> ()
    %cst_24 = arith.constant dense<0.000000e+00> : vector<1x8x128xf32>
    %56 = tpu.matmul %55, %14, %cst_24 {dimension_numbers = #tpu.dot_dimension_numbers<[2], [1], [1], [2], [0, 0, 0, 1, 1, 2], [0], [0]>} : vector<1x8x8xbf16>, vector<1x8x128xbf16>, vector<1x8x128xf32> -> vector<1x8x128xf32>
    "tpu.trace_stop"() : () -> ()
    %57 = arith.addf %54, %56 : vector<1x8x128xf32>
    %58 = tpu.reciprocal %51 {approx = true} : vector<1x8x1xf32> -> vector<1x8x1xf32>
    %59 = vector.broadcast %58 : vector<1x8x1xf32> to vector<1x8x128xf32>
    %60 = arith.mulf %57, %59 : vector<1x8x128xf32>
    %61 = vector.shape_cast %60 : vector<1x8x128xf32> to vector<8x128xf32>
    %62 = arith.truncf %61 : vector<8x128xf32> to vector<8x128xbf16>
    %c0_25 = arith.constant 0 : index
    %c0_26 = arith.constant 0 : index
    %63 = vector.load %arg7[%c0_25, %c0_26] : memref<128x128xbf16, #tpu.memory_space<vmem>>, vector<128x128xbf16>
    %cst_27 = arith.constant dense<0.000000e+00> : vector<8x128xf32>
    %64 = tpu.matmul %62, %63, %cst_27 {dimension_numbers = #tpu.dot_dimension_numbers<[1], [0], [0], [1], [0, 0, 1, 1], [], []>} : vector<8x128xbf16>, vector<128x128xbf16>, vector<8x128xf32> -> vector<8x128xf32>
    %65 = arith.extf %1 : vector<8x128xbf16> to vector<8x128xf32>
    %66 = arith.addf %65, %64 : vector<8x128xf32>
    %cst_28 = arith.constant dense<0.000000e+00> : vector<8xf32>
    %67 = vector.multi_reduction <add>, %66, %cst_28 [1] : vector<8x128xf32> to vector<8xf32>
    %68 = vector.shape_cast %67 : vector<8xf32> to vector<8x1xf32>
    %cst_29 = arith.constant 1.280000e+02 : f32
    %69 = vector.broadcast %cst_29 : f32 to vector<8x1xf32>
    %70 = arith.divf %68, %69 : vector<8x1xf32>
    %71 = vector.broadcast %70 : vector<8x1xf32> to vector<8x128xf32>
    %72 = arith.subf %66, %71 : vector<8x128xf32>
    %73 = arith.mulf %72, %72 : vector<8x128xf32>
    %cst_30 = arith.constant dense<0.000000e+00> : vector<8xf32>
    %74 = vector.multi_reduction <add>, %73, %cst_30 [1] : vector<8x128xf32> to vector<8xf32>
    %75 = vector.shape_cast %74 : vector<8xf32> to vector<8x1xf32>
    %cst_31 = arith.constant 1.280000e+02 : f32
    %76 = vector.broadcast %cst_31 : f32 to vector<8x1xf32>
    %77 = arith.divf %75, %76 : vector<8x1xf32>
    %78 = vector.broadcast %70 : vector<8x1xf32> to vector<8x128xf32>
    %79 = arith.subf %66, %78 : vector<8x128xf32>
    %cst_32 = arith.constant 9.99999974E-6 : f32
    %80 = vector.broadcast %cst_32 : f32 to vector<8x1xf32>
    %81 = arith.addf %77, %80 : vector<8x1xf32>
    %82 = math.rsqrt %81 : vector<8x1xf32>
    %83 = vector.broadcast %82 : vector<8x1xf32> to vector<8x128xf32>
    %84 = arith.mulf %79, %83 : vector<8x128xf32>
    %c0_33 = arith.constant 0 : index
    %c0_34 = arith.constant 0 : index
    %85 = vector.load %arg8[%c0_33, %c0_34] : memref<1x128xf32, #tpu.memory_space<vmem>>, vector<1x128xf32>
    %86 = vector.broadcast %85 : vector<1x128xf32> to vector<8x128xf32>
    %87 = arith.mulf %84, %86 : vector<8x128xf32>
    %c0_35 = arith.constant 0 : index
    %c0_36 = arith.constant 0 : index
    %88 = vector.load %arg9[%c0_35, %c0_36] : memref<1x128xf32, #tpu.memory_space<vmem>>, vector<1x128xf32>
    %89 = vector.broadcast %88 : vector<1x128xf32> to vector<8x128xf32>
    %90 = arith.addf %87, %89 : vector<8x128xf32>
    %91 = vector.shape_cast %90 : vector<8x128xf32> to vector<1x8x128xf32>
    %c0_37 = arith.constant 0 : index
    %c0_38 = arith.constant 0 : index
    %92 = vector.load %arg10[%c0_37, %c0_38] : memref<1x128xf32, #tpu.memory_space<vmem>>, vector<1x128xf32>
    %93 = vector.shape_cast %92 : vector<1x128xf32> to vector<1x1x128xf32>
    %94 = vector.broadcast %93 : vector<1x1x128xf32> to vector<1x8x128xf32>
    %95 = arith.mulf %91, %94 : vector<1x8x128xf32>
    %cst_39 = arith.constant dense<0.000000e+00> : vector<1x8xf32>
    %96 = vector.multi_reduction <add>, %95, %cst_39 [2] : vector<1x8x128xf32> to vector<1x8xf32>
    %c0_40 = arith.constant 0 : index
    %c0_41 = arith.constant 0 : index
    %97 = vector.load %arg11[%c0_40, %c0_41] : memref<1x1xf32, #tpu.memory_space<vmem>>, vector<1x1xf32>
    %98 = vector.broadcast %97 : vector<1x1xf32> to vector<1x8xf32>
    %99 = arith.addf %96, %98 : vector<1x8xf32>
    %c0_42 = arith.constant 0 : index
    %c0_43 = arith.constant 0 : index
    %c0_44 = arith.constant 0 : index
    %100 = vector.load %arg5[%c0_42, %c0_43, %c0_44] : memref<1x1x1xf32, #tpu.memory_space<vmem>>, vector<1x1x1xf32>
    %101 = vector.shape_cast %100 : vector<1x1x1xf32> to vector<1x1xf32>
    %102 = vector.extract_strided_slice %15 {offsets = [0, 0, 16], sizes = [1, 1, 8], strides = [1, 1, 1]} : vector<1x1x24xi32> to vector<1x1x8xi32>
    %103 = vector.shape_cast %102 : vector<1x1x8xi32> to vector<1x8xi32>
    %c0_i32_45 = arith.constant 0 : i32
    %104 = vector.broadcast %c0_i32_45 : i32 to vector<1x8xi32>
    %105 = arith.cmpi sgt, %103, %104 : vector<1x8xi32>
    %106 = arith.extui %105 : vector<1x8xi1> to vector<1x8xi32>
    %107 = arith.sitofp %106 : vector<1x8xi32> to vector<1x8xf32>
    %cst_46 = arith.constant 0.000000e+00 : f32
    %108 = vector.broadcast %cst_46 : f32 to vector<1x8xf32>
    %109 = arith.maximumf %99, %108 : vector<1x8xf32>
    %110 = vector.broadcast %101 : vector<1x1xf32> to vector<1x8xf32>
    %111 = arith.mulf %99, %110 : vector<1x8xf32>
    %112 = arith.subf %109, %111 : vector<1x8xf32>
    %113 = math.absf %99 : vector<1x8xf32>
    %cst_47 = arith.constant 0.000000e+00 : f32
    %114 = vector.broadcast %cst_47 : f32 to vector<1x8xf32>
    %115 = arith.subf %114, %113 : vector<1x8xf32>
    %116 = math.exp %115 : vector<1x8xf32>
    %cst_48 = arith.constant 1.000000e+00 : f32
    %117 = vector.broadcast %cst_48 : f32 to vector<1x8xf32>
    %118 = arith.addf %117, %116 : vector<1x8xf32>
    %119 = math.log %118 : vector<1x8xf32>
    %120 = arith.addf %112, %119 : vector<1x8xf32>
    %cst_49 = arith.constant 5.000000e-01 : f32
    %121 = vector.broadcast %cst_49 : f32 to vector<1x8xf32>
    %122 = arith.cmpf oge, %99, %121 : vector<1x8xf32>
    %123 = arith.extui %122 : vector<1x8xi1> to vector<1x8xi32>
    %124 = arith.sitofp %123 : vector<1x8xi32> to vector<1x8xf32>
    %125 = vector.broadcast %101 : vector<1x1xf32> to vector<1x8xf32>
    %126 = arith.cmpf oeq, %124, %125 : vector<1x8xf32>
    %127 = arith.extui %126 : vector<1x8xi1> to vector<1x8xi32>
    %128 = arith.sitofp %127 : vector<1x8xi32> to vector<1x8xf32>
    %129 = arith.mulf %120, %107 : vector<1x8xf32>
    %130 = vector.shape_cast %129 : vector<1x8xf32> to vector<1x1x8xf32>
    %cst_50 = arith.constant dense<0.000000e+00> : vector<1xf32>
    %131 = vector.multi_reduction <add>, %130, %cst_50 [1, 2] : vector<1x1x8xf32> to vector<1xf32>
    %132 = vector.shape_cast %131 : vector<1xf32> to vector<1x1x1xf32>
    %133 = vector.extract %132[0, 0, 0] : f32 from vector<1x1x1xf32>
    %134 = vector.broadcast %133 : f32 to vector<1x1xf32>
    %135 = arith.mulf %128, %107 : vector<1x8xf32>
    %136 = vector.shape_cast %135 : vector<1x8xf32> to vector<1x1x8xf32>
    %cst_51 = arith.constant dense<0.000000e+00> : vector<1xf32>
    %137 = vector.multi_reduction <add>, %136, %cst_51 [1, 2] : vector<1x1x8xf32> to vector<1xf32>
    %138 = vector.shape_cast %137 : vector<1xf32> to vector<1x1x1xf32>
    %139 = vector.extract %138[0, 0, 0] : f32 from vector<1x1x1xf32>
    %140 = vector.broadcast %139 : f32 to vector<1x1xf32>
    %141 = vector.shape_cast %107 : vector<1x8xf32> to vector<1x1x8xf32>
    %cst_52 = arith.constant dense<0.000000e+00> : vector<1xf32>
    %142 = vector.multi_reduction <add>, %141, %cst_52 [1, 2] : vector<1x1x8xf32> to vector<1xf32>
    %143 = vector.shape_cast %142 : vector<1xf32> to vector<1x1x1xf32>
    %144 = vector.extract %143[0, 0, 0] : f32 from vector<1x1x1xf32>
    %145 = vector.broadcast %144 : f32 to vector<1x1xf32>
    %146 = tpu.iota {dimensions = array<i32: 0>} : vector<8x128xi32>
    %147 = tpu.iota {dimensions = array<i32: 1>} : vector<8x128xi32>
    %c0_i32_53 = arith.constant 0 : i32
    %148 = vector.broadcast %c0_i32_53 : i32 to vector<8x128xi32>
    %149 = arith.cmpi eq, %146, %148 : vector<8x128xi32>
    %c0_i32_54 = arith.constant 0 : i32
    %150 = vector.broadcast %c0_i32_54 : i32 to vector<8x128xi32>
    %151 = arith.cmpi eq, %147, %150 : vector<8x128xi32>
    %152 = arith.andi %149, %151 : vector<8x128xi1>
    %cst_55 = arith.constant 0.000000e+00 : f32
    %153 = vector.shape_cast %134 : vector<1x1xf32> to vector<1x1xf32>
    %154 = vector.broadcast %153 : vector<1x1xf32> to vector<8x128xf32>
    %155 = vector.broadcast %cst_55 : f32 to vector<8x128xf32>
    %156 = arith.select %152, %154, %155 : vector<8x128xi1>, vector<8x128xf32>
    %c1_i32 = arith.constant 1 : i32
    %157 = vector.broadcast %c1_i32 : i32 to vector<8x128xi32>
    %158 = arith.cmpi eq, %147, %157 : vector<8x128xi32>
    %159 = arith.andi %149, %158 : vector<8x128xi1>
    %cst_56 = arith.constant 0.000000e+00 : f32
    %160 = vector.shape_cast %140 : vector<1x1xf32> to vector<1x1xf32>
    %161 = vector.broadcast %160 : vector<1x1xf32> to vector<8x128xf32>
    %162 = vector.broadcast %cst_56 : f32 to vector<8x128xf32>
    %163 = arith.select %159, %161, %162 : vector<8x128xi1>, vector<8x128xf32>
    %164 = arith.addf %156, %163 : vector<8x128xf32>
    %c2_i32 = arith.constant 2 : i32
    %165 = vector.broadcast %c2_i32 : i32 to vector<8x128xi32>
    %166 = arith.cmpi eq, %147, %165 : vector<8x128xi32>
    %167 = arith.andi %149, %166 : vector<8x128xi1>
    %cst_57 = arith.constant 0.000000e+00 : f32
    %168 = vector.shape_cast %145 : vector<1x1xf32> to vector<1x1xf32>
    %169 = vector.broadcast %168 : vector<1x1xf32> to vector<8x128xf32>
    %170 = vector.broadcast %cst_57 : f32 to vector<8x128xf32>
    %171 = arith.select %167, %169, %170 : vector<8x128xi1>, vector<8x128xf32>
    %172 = arith.addf %164, %171 : vector<8x128xf32>
    %c0_58 = arith.constant 0 : index
    %c0_59 = arith.constant 0 : index
    %c0_60 = arith.constant 0 : index
    %173 = vector.load %arg12[%c0_58, %c0_59, %c0_60] : memref<1x8x128xf32, #tpu.memory_space<vmem>>, vector<1x8x128xf32>
    %174 = vector.shape_cast %173 : vector<1x8x128xf32> to vector<8x128xf32>
    %175 = vector.shape_cast %172 : vector<8x128xf32> to vector<1x8x128xf32>
    tpu.vector_store %arg12[%c0_58, %c0_59, %c0_60], %175 {strides = array<i32>} : memref<1x8x128xf32, #tpu.memory_space<vmem>>, vector<1x8x128xf32>,
    return
  }
  func.func @transform_0(%arg0: i32) -> (i32, i32, i32) {
    %c0_i32 = arith.constant 0 : i32
    %c0_i32_0 = arith.constant 0 : i32
    %c0_i32_1 = arith.constant 0 : i32
    return %arg0, %c0_i32, %c0_i32_0 : i32, i32, i32
  }
  func.func @transform_1(%arg0: i32) -> (i32, i32, i32) {
    %c0_i32 = arith.constant 0 : i32
    %c0_i32_0 = arith.constant 0 : i32
    %c0_i32_1 = arith.constant 0 : i32
    return %arg0, %c0_i32, %c0_i32_0 : i32, i32, i32
  }
  func.func @transform_2(%arg0: i32) -> (i32, i32, i32) {
    %c0_i32 = arith.constant 0 : i32
    %c0_i32_0 = arith.constant 0 : i32
    %c0_i32_1 = arith.constant 0 : i32
    return %arg0, %c0_i32, %c0_i32_0 : i32, i32, i32
  }
  func.func @transform_3(%arg0: i32) -> (i32, i32, i32) {
    %c0_i32 = arith.constant 0 : i32
    %c0_i32_0 = arith.constant 0 : i32
    %c0_i32_1 = arith.constant 0 : i32
    return %arg0, %c0_i32, %c0_i32_0 : i32, i32, i32
  }
  func.func @transform_4(%arg0: i32) -> (i32, i32, i32) {
    %c0_i32 = arith.constant 0 : i32
    %c0_i32_0 = arith.constant 0 : i32
    %c0_i32_1 = arith.constant 0 : i32
    return %arg0, %c0_i32, %c0_i32_0 : i32, i32, i32
  }
  func.func @transform_5(%arg0: i32) -> (i32, i32) {
    %c0_i32 = arith.constant 0 : i32
    %c0_i32_0 = arith.constant 0 : i32
    %c0_i32_1 = arith.constant 0 : i32
    return %c0_i32, %c0_i32_0 : i32, i32
  }
  func.func @transform_6(%arg0: i32) -> (i32, i32) {
    %c0_i32 = arith.constant 0 : i32
    %c0_i32_0 = arith.constant 0 : i32
    %c0_i32_1 = arith.constant 0 : i32
    return %c0_i32, %c0_i32_0 : i32, i32
  }
  func.func @transform_7(%arg0: i32) -> (i32, i32) {
    %c0_i32 = arith.constant 0 : i32
    %c0_i32_0 = arith.constant 0 : i32
    %c0_i32_1 = arith.constant 0 : i32
    return %c0_i32, %c0_i32_0 : i32, i32
  }
  func.func @transform_8(%arg0: i32) -> (i32, i32) {
    %c0_i32 = arith.constant 0 : i32
    %c0_i32_0 = arith.constant 0 : i32
    %c0_i32_1 = arith.constant 0 : i32
    return %c0_i32, %c0_i32_0 : i32, i32
  }
  func.func @transform_9(%arg0: i32) -> (i32, i32) {
    %c0_i32 = arith.constant 0 : i32
    %c0_i32_0 = arith.constant 0 : i32
    %c0_i32_1 = arith.constant 0 : i32
    return %c0_i32, %c0_i32_0 : i32, i32
  }
  func.func @transform_10(%arg0: i32) -> (i32, i32) {
    %c0_i32 = arith.constant 0 : i32
    %c0_i32_0 = arith.constant 0 : i32
    %c0_i32_1 = arith.constant 0 : i32
    return %c0_i32, %c0_i32_0 : i32, i32
  }
  func.func @transform_11(%arg0: i32) -> (i32, i32, i32) {
    %c0_i32 = arith.constant 0 : i32
    %c0_i32_0 = arith.constant 0 : i32
    %c0_i32_1 = arith.constant 0 : i32
    return %arg0, %c0_i32, %c0_i32_0 : i32, i32, i32
  }
}

</mosaic_0001>

<llo_original>
// kernel: tpu_custom_call.1
$region0: #{tpu_custom_call.1}
  #allocation0 [shape = 'u32[]', space=smem, size = 0x4, offset = 0x4, fixed_abs, tag = 'smem constant byte address 0x4 - core index']
  #allocation1 [shape = 'u32[144,128]{1,0:T(1,128)}', space=vmem, size = 0x12000, scoped, tag = 'internal scratch']
  #allocation2 [shape = 'f32[1,1]{1,0:T(1,128)S(1)}', space=vmem, size = 0x200, scoped, tag = 'scoped memory for tpu_custom_call.1']
  %s0 = inlined_call_operand.hbm [shape: bf16[2,8,128], index: 0, kind: input, shape index: {}]
  %s1 = inlined_call_operand.hbm [shape: bf16[2,16,128], index: 1, kind: input, shape index: {}]
  %s2 = inlined_call_operand.hbm [shape: bf16[2,16,128], index: 2, kind: input, shape index: {}]
  %s3 = inlined_call_operand.vmem [shape: s32[2,1,24], index: 3, kind: input, shape index: {}]
  %s4 = inlined_call_operand.vmem [shape: f32[2,1,1], index: 4, kind: input, shape index: {}]
  %s5 = inlined_call_operand.hbm [shape: bf16[128,384], index: 5, kind: input, shape index: {}]
  %s6 = inlined_call_operand.hbm [shape: bf16[128,128], index: 6, kind: input, shape index: {}]
  %s7 = inlined_call_operand.vmem [shape: f32[1,128], index: 7, kind: input, shape index: {}]
  %s8 = inlined_call_operand.vmem [shape: f32[1,128], index: 8, kind: input, shape index: {}]
  %s9 = inlined_call_operand.vmem [shape: f32[1,128], index: 9, kind: input, shape index: {}]
  %s10 = inlined_call_operand.<no memory space> [shape: f32[1,1], index: 10, kind: input, shape index: {}]
  %s11 = inlined_call_operand.hbm [shape: f32[2,8,128], index: 11, kind: output, shape index: {}]
  %s12 = sld [smem:[#allocation0]]
  $region97: #{tpu_custom_call.1} parent=0
    _
  %s14 = ssub.s32 1, %s12
  %s15 = scalar_select 0, %s14, %s12
  %v16 = vstv %s10
  %17 = vst [vmem:[#allocation2] sm:$0x1] %v16
  $region1: #{tpu_custom_call.1} parent=0
    #allocation3 [shape = 'u8[4096]{0}', space=vmem, size = 0x1000, scoped, tag = 'input window, operand 0']
    #allocation4 [shape = 's32[2]{0}', space=sflag, size = 0x8, scoped, tag = 'scoped memory for tpu_custom_call.1']
    #allocation5 [shape = 's32[2]{0}', space=sflag, size = 0x8, scoped, tag = 'scoped memory for tpu_custom_call.1']
    #allocation6 [shape = 'u8[8192]{0}', space=vmem, size = 0x2000, scoped, tag = 'input window, operand 1']
    #allocation7 [shape = 's32[2]{0}', space=sflag, size = 0x8, scoped, tag = 'scoped memory for tpu_custom_call.1']
    #allocation8 [shape = 'u8[8192]{0}', space=vmem, size = 0x2000, scoped, tag = 'input window, operand 2']
    #allocation9 [shape = 'u8[98304]{0}', space=vmem, size = 0x18000, scoped, tag = 'input window, operand 5, single buffered']
    #allocation10 [shape = 's32[1]{0}', space=sflag, size = 0x4, scoped, tag = 'scoped memory for tpu_custom_call.1']
    #allocation11 [shape = 'u8[32768]{0}', space=vmem, size = 0x8000, scoped, tag = 'input window, operand 6, single buffered']
    #allocation12 [shape = 'u8[8192]{0}', space=vmem, size = 0x2000, scoped, tag = 'output window, operand 0']
    %18 = vsyncpa [#allocation4], 0
    %s19 = scalar_lea.sflag [#allocation4], 1
    %20 = vsyncpa %s19, 0
    %21 = vsyncpa [#allocation7], 0
    %s22 = scalar_lea.sflag [#allocation7], 1
    %23 = vsyncpa %s22, 0
    %24 = vsyncpa [#allocation10], 0
    %25 = vsyncpa [#allocation5], 0
    %s26 = scalar_lea.sflag [#allocation5], 1
    %27 = vsyncpa %s26, 0
    loop: start=0, step=1, limit=4
    $region2: #{tpu_custom_call.1} parent=1 // loop_pre_header
      _
    $region3: #{tpu_custom_call.1} parent=1 // loop_header
      %s29 = sphi 0, %s33
      %p30 = scmp.ge.s32.totalorder %s29, 4
      %s39 = sphi 0, %s41
      %s42 = sphi 0, %s39
      %s43 = sphi 0, %s42
      %s59 = sphi 0, %s43
      %s65 = sphi 0, %s67
      %s68 = sphi 0, %s65
      %s69 = sphi 0, %s68
      %s85 = sphi 0, %s69
      %s91 = sphi 0, %s93
      %s94 = sphi 0, %s91
      %s95 = sphi 0, %s94
      %s111 = sphi 0, %s95
      %s117 = sphi 0, %s119
      %s120 = sphi 0, %s117
      %s121 = sphi 0, %s120
      %s137 = sphi 0, %s121
      %s143 = sphi 0, %s145
      %s146 = sphi 0, %s143
      %s147 = sphi 0, %s146
      %s163 = sphi 0, %s147
      %s167 = sphi 0, %s167
      %s169 = sphi 0, %s167
      %s170 = sphi 0, %s169
      %s184 = sphi 0, %s170
      %s188 = sphi 0, %s188
      %s190 = sphi 0, %s188
      %s191 = sphi 0, %s190
      %s205 = sphi 0, %s191
      %s209 = sphi 0, %s209
      %s211 = sphi 0, %s209
      %s212 = sphi 0, %s211
      %s226 = sphi 0, %s212
      %s230 = sphi 0, %s230
      %s232 = sphi 0, %s230
      %s233 = sphi 0, %s232
      %s247 = sphi 0, %s233
      %s251 = sphi 0, %s251
      %s253 = sphi 0, %s251
      %s254 = sphi 0, %s253
      %s268 = sphi 0, %s254
      %s272 = sphi 0, %s272
      %s274 = sphi 0, %s272
      %s275 = sphi 0, %s274
      %s289 = sphi 0, %s275
      %s295 = sphi 0, %s297
      %s298 = sphi 0, %s295
      %s299 = sphi 0, %s298
      %s315 = sphi 0, %s299
    $region4: #{tpu_custom_call.1} parent=1 // loop_header_branch
      %32 = sbr.rel (%p30) target = $region8
    $region5: #{tpu_custom_call.1} parent=1 // loop_body
      %s34 = ssub.s32 %s29, 1
      %s35 = ssub.s32 %s29, 2
      %s36 = sadd.s32 %s29, 1
      %s37 = ssub.s32 %s29, %s36
      %p38 = scmp.eq.s32.totalorder %s37, 0
      %s40 = sadd.s32 %s39, 1
      %s41 = scalar_select %p38, %s39, %s40
      %p44 = pneg %p38
      %p45 = scmp.eq.s32.totalorder %s29, 1
      %p46 = por %p44, %p45
      %p47 = scmp.ne.s32.totalorder %s39, %s42
      %p48 = scmp.eq.s32.totalorder %s29, 0
      %p49 = por %p47, %p48
      %p50 = scmp.ne.s32.totalorder %s39, %s42
      %p51 = scmp.eq.s32.totalorder %s34, 1
      %p52 = por %p50, %p51
      %p53 = scmp.ne.s32.totalorder %s42, %s43
      %p54 = scmp.eq.s32.totalorder %s34, 0
      %p55 = por %p53, %p54
      %p56 = scmp.ne.s32.totalorder %s42, %s43
      %p57 = scmp.eq.s32.totalorder %s35, 1
      %p58 = por %p56, %p57
      %p60 = scmp.ne.s32.totalorder %s43, %s59
      %p61 = scmp.eq.s32.totalorder %s35, 0
      %p62 = por %p60, %p61
      %s63 = ssub.s32 %s29, %s36
      %p64 = scmp.eq.s32.totalorder %s63, 0
      %s66 = sadd.s32 %s65, 1
      %s67 = scalar_select %p64, %s65, %s66
      %p70 = pneg %p64
      %p71 = scmp.eq.s32.totalorder %s29, 1
      %p72 = por %p70, %p71
      %p73 = scmp.ne.s32.totalorder %s65, %s68
      %p74 = scmp.eq.s32.totalorder %s29, 0
      %p75 = por %p73, %p74
      %p76 = scmp.ne.s32.totalorder %s65, %s68
      %p77 = scmp.eq.s32.totalorder %s34, 1
      %p78 = por %p76, %p77
      %p79 = scmp.ne.s32.totalorder %s68, %s69
      %p80 = scmp.eq.s32.totalorder %s34, 0
      %p81 = por %p79, %p80
      %p82 = scmp.ne.s32.totalorder %s68, %s69
      %p83 = scmp.eq.s32.totalorder %s35, 1
      %p84 = por %p82, %p83
      %p86 = scmp.ne.s32.totalorder %s69, %s85
      %p87 = scmp.eq.s32.totalorder %s35, 0
      %p88 = por %p86, %p87
      %s89 = ssub.s32 %s29, %s36
      %p90 = scmp.eq.s32.totalorder %s89, 0
      %s92 = sadd.s32 %s91, 1
      %s93 = scalar_select %p90, %s91, %s92
      %p96 = pneg %p90
      %p97 = scmp.eq.s32.totalorder %s29, 1
      %p98 = por %p96, %p97
      %p99 = scmp.ne.s32.totalorder %s91, %s94
      %p100 = scmp.eq.s32.totalorder %s29, 0
      %p101 = por %p99, %p100
      %p102 = scmp.ne.s32.totalorder %s91, %s94
      %p103 = scmp.eq.s32.totalorder %s34, 1
      %p104 = por %p102, %p103
      %p105 = scmp.ne.s32.totalorder %s94, %s95
      %p106 = scmp.eq.s32.totalorder %s34, 0
      %p107 = por %p105, %p106
      %p108 = scmp.ne.s32.totalorder %s94, %s95
      %p109 = scmp.eq.s32.totalorder %s35, 1
      %p110 = por %p108, %p109
      %p112 = scmp.ne.s32.totalorder %s95, %s111
      %p113 = scmp.eq.s32.totalorder %s35, 0
      %p114 = por %p112, %p113
      %s115 = ssub.s32 %s29, %s36
      %p116 = scmp.eq.s32.totalorder %s115, 0
      %s118 = sadd.s32 %s117, 1
      %s119 = scalar_select %p116, %s117, %s118
      %p122 = pneg %p116
      %p123 = scmp.eq.s32.totalorder %s29, 1
      %p124 = por %p122, %p123
      %p125 = scmp.ne.s32.totalorder %s117, %s120
      %p126 = scmp.eq.s32.totalorder %s29, 0
      %p127 = por %p125, %p126
      %p128 = scmp.ne.s32.totalorder %s117, %s120
      %p129 = scmp.eq.s32.totalorder %s34, 1
      %p130 = por %p128, %p129
      %p131 = scmp.ne.s32.totalorder %s120, %s121
      %p132 = scmp.eq.s32.totalorder %s34, 0
      %p133 = por %p131, %p132
      %p134 = scmp.ne.s32.totalorder %s120, %s121
      %p135 = scmp.eq.s32.totalorder %s35, 1
      %p136 = por %p134, %p135
      %p138 = scmp.ne.s32.totalorder %s121, %s137
      %p139 = scmp.eq.s32.totalorder %s35, 0
      %p140 = por %p138, %p139
      %s141 = ssub.s32 %s29, %s36
      %p142 = scmp.eq.s32.totalorder %s141, 0
      %s144 = sadd.s32 %s143, 1
      %s145 = scalar_select %p142, %s143, %s144
      %p148 = pneg %p142
      %p149 = scmp.eq.s32.totalorder %s29, 1
      %p150 = por %p148, %p149
      %p151 = scmp.ne.s32.totalorder %s143, %s146
      %p152 = scmp.eq.s32.totalorder %s29, 0
      %p153 = por %p151, %p152
      %p154 = scmp.ne.s32.totalorder %s143, %s146
      %p155 = scmp.eq.s32.totalorder %s34, 1
      %p156 = por %p154, %p155
      %p157 = scmp.ne.s32.totalorder %s146, %s147
      %p158 = scmp.eq.s32.totalorder %s34, 0
      %p159 = por %p157, %p158
      %p160 = scmp.ne.s32.totalorder %s146, %s147
      %p161 = scmp.eq.s32.totalorder %s35, 1
      %p162 = por %p160, %p161
      %p164 = scmp.ne.s32.totalorder %s147, %s163
      %p165 = scmp.eq.s32.totalorder %s35, 0
      %p166 = por %p164, %p165
      %s168 = sadd.s32 %s167, 1
      %p171 = scmp.eq.s32.totalorder %s29, 1
      %p172 = scmp.ne.s32.totalorder %s167, %s169
      %p173 = scmp.eq.s32.totalorder %s29, 0
      %p174 = por %p172, %p173
      %p175 = scmp.ne.s32.totalorder %s167, %s169
      %p176 = scmp.eq.s32.totalorder %s34, 1
      %p177 = por %p175, %p176
      %p178 = scmp.ne.s32.totalorder %s169, %s170
      %p179 = scmp.eq.s32.totalorder %s34, 0
      %p180 = por %p178, %p179
      %p181 = scmp.ne.s32.totalorder %s169, %s170
      %p182 = scmp.eq.s32.totalorder %s35, 1
      %p183 = por %p181, %p182
      %p185 = scmp.ne.s32.totalorder %s170, %s184
      %p186 = scmp.eq.s32.totalorder %s35, 0
      %p187 = por %p185, %p186
      %s189 = sadd.s32 %s188, 1
      %p192 = scmp.eq.s32.totalorder %s29, 1
      %p193 = scmp.ne.s32.totalorder %s188, %s190
      %p194 = scmp.eq.s32.totalorder %s29, 0
      %p195 = por %p193, %p194
      %p196 = scmp.ne.s32.totalorder %s188, %s190
      %p197 = scmp.eq.s32.totalorder %s34, 1
      %p198 = por %p196, %p197
      %p199 = scmp.ne.s32.totalorder %s190, %s191
      %p200 = scmp.eq.s32.totalorder %s34, 0
      %p201 = por %p199, %p200
      %p202 = scmp.ne.s32.totalorder %s190, %s191
      %p203 = scmp.eq.s32.totalorder %s35, 1
      %p204 = por %p202, %p203
      %p206 = scmp.ne.s32.totalorder %s191, %s205
      %p207 = scmp.eq.s32.totalorder %s35, 0
      %p208 = por %p206, %p207
      %s210 = sadd.s32 %s209, 1
      %p213 = scmp.eq.s32.totalorder %s29, 1
      %p214 = scmp.ne.s32.totalorder %s209, %s211
      %p215 = scmp.eq.s32.totalorder %s29, 0
      %p216 = por %p214, %p215
      %p217 = scmp.ne.s32.totalorder %s209, %s211
      %p218 = scmp.eq.s32.totalorder %s34, 1
      %p219 = por %p217, %p218
      %p220 = scmp.ne.s32.totalorder %s211, %s212
      %p221 = scmp.eq.s32.totalorder %s34, 0
      %p222 = por %p220, %p221
      %p223 = scmp.ne.s32.totalorder %s211, %s212
      %p224 = scmp.eq.s32.totalorder %s35, 1
      %p225 = por %p223, %p224
      %p227 = scmp.ne.s32.totalorder %s212, %s226
      %p228 = scmp.eq.s32.totalorder %s35, 0
      %p229 = por %p227, %p228
      %s231 = sadd.s32 %s230, 1
      %p234 = scmp.eq.s32.totalorder %s29, 1
      %p235 = scmp.ne.s32.totalorder %s230, %s232
      %p236 = scmp.eq.s32.totalorder %s29, 0
      %p237 = por %p235, %p236
      %p238 = scmp.ne.s32.totalorder %s230, %s232
      %p239 = scmp.eq.s32.totalorder %s34, 1
      %p240 = por %p238, %p239
      %p241 = scmp.ne.s32.totalorder %s232, %s233
      %p242 = scmp.eq.s32.totalorder %s34, 0
      %p243 = por %p241, %p242
      %p244 = scmp.ne.s32.totalorder %s232, %s233
      %p245 = scmp.eq.s32.totalorder %s35, 1
      %p246 = por %p244, %p245
      %p248 = scmp.ne.s32.totalorder %s233, %s247
      %p249 = scmp.eq.s32.totalorder %s35, 0
      %p250 = por %p248, %p249
      %s252 = sadd.s32 %s251, 1
      %p255 = scmp.eq.s32.totalorder %s29, 1
      %p256 = scmp.ne.s32.totalorder %s251, %s253
      %p257 = scmp.eq.s32.totalorder %s29, 0
      %p258 = por %p256, %p257
      %p259 = scmp.ne.s32.totalorder %s251, %s253
      %p260 = scmp.eq.s32.totalorder %s34, 1
      %p261 = por %p259, %p260
      %p262 = scmp.ne.s32.totalorder %s253, %s254
      %p263 = scmp.eq.s32.totalorder %s34, 0
      %p264 = por %p262, %p263
      %p265 = scmp.ne.s32.totalorder %s253, %s254
      %p266 = scmp.eq.s32.totalorder %s35, 1
      %p267 = por %p265, %p266
      %p269 = scmp.ne.s32.totalorder %s254, %s268
      %p270 = scmp.eq.s32.totalorder %s35, 0
      %p271 = por %p269, %p270
      %s273 = sadd.s32 %s272, 1
      %p276 = scmp.eq.s32.totalorder %s29, 1
      %p277 = scmp.ne.s32.totalorder %s272, %s274
      %p278 = scmp.eq.s32.totalorder %s29, 0
      %p279 = por %p277, %p278
      %p280 = scmp.ne.s32.totalorder %s272, %s274
      %p281 = scmp.eq.s32.totalorder %s34, 1
      %p282 = por %p280, %p281
      %p283 = scmp.ne.s32.totalorder %s274, %s275
      %p284 = scmp.eq.s32.totalorder %s34, 0
      %p285 = por %p283, %p284
      %p286 = scmp.ne.s32.totalorder %s274, %s275
      %p287 = scmp.eq.s32.totalorder %s35, 1
      %p288 = por %p286, %p287
      %p290 = scmp.ne.s32.totalorder %s275, %s289
      %p291 = scmp.eq.s32.totalorder %s35, 0
      %p292 = por %p290, %p291
      %s293 = ssub.s32 %s29, %s36
      %p294 = scmp.eq.s32.totalorder %s293, 0
      %s296 = sadd.s32 %s295, 1
      %s297 = scalar_select %p294, %s295, %s296
      %p300 = pneg %p294
      %p301 = scmp.eq.s32.totalorder %s29, 1
      %p302 = por %p300, %p301
      %p303 = scmp.ne.s32.totalorder %s295, %s298
      %p304 = scmp.eq.s32.totalorder %s29, 0
      %p305 = por %p303, %p304
      %p306 = scmp.ne.s32.totalorder %s295, %s298
      %p307 = scmp.eq.s32.totalorder %s34, 1
      %p308 = por %p306, %p307
      %p309 = scmp.ne.s32.totalorder %s298, %s299
      %p310 = scmp.eq.s32.totalorder %s34, 0
      %p311 = por %p309, %p310
      %p312 = scmp.ne.s32.totalorder %s298, %s299
      %p313 = scmp.eq.s32.totalorder %s35, 1
      %p314 = por %p312, %p313
      %p316 = scmp.ne.s32.totalorder %s299, %s315
      %p317 = scmp.eq.s32.totalorder %s35, 0
      %p318 = por %p316, %p317
      %p319 = scmp.le.s32.totalorder 1, %s29
      %p320 = scmp.lt.s32.totalorder %s29, 3
      %p321 = pnand %p319, %p320
      %p322 = pneg %p321
      // Predicated region
      $region9: #{tpu_custom_call.1} parent=5 // pred_check
        _
      $region10: #{tpu_custom_call.1} parent=5 // pred_check_branch
        %324 = sbr.rel (%p321) target = $region12
      $region11: #{tpu_custom_call.1} parent=5 // pred_region
        %s325 = ssub.s32 %s29, 1
        // Predicated region
        $region13: #{tpu_custom_call.1} parent=11 // pred_check
          %p326 = pneg %p180
        $region14: #{tpu_custom_call.1} parent=11 // pred_check_branch
          %328 = sbr.rel (%p326) target = $region16
        $region15: #{tpu_custom_call.1} parent=11 // pred_region
          %s330 = ssub.s32 3072, 3072
          %331 = vsyncadd [#allocation10], %s330
          %s332 = sshll.u32 [#allocation9], 4
          %s333 = int_to_ptr.vmem [resolvable:$true] %s332
          %338 = dma.hbm_to_vmem [thread:$0]  %s5, 3072, %s333, [#allocation10], 192, 192, 12
        $region16: #{tpu_custom_call.1} parent=11 // pred_fallthru
          _
        // Predicated region
        $region17: #{tpu_custom_call.1} parent=11 // pred_check
          %p339 = pneg %p201
        $region18: #{tpu_custom_call.1} parent=11 // pred_check_branch
          %341 = sbr.rel (%p339) target = $region20
        $region19: #{tpu_custom_call.1} parent=11 // pred_region
          %s343 = ssub.s32 1024, 1024
          %344 = vsyncadd [#allocation10], %s343
          %s345 = sshll.u32 [#allocation11], 4
          %s346 = int_to_ptr.vmem [resolvable:$true] %s345
          %351 = dma.hbm_to_vmem [thread:$0]  %s6, 1024, %s346, [#allocation10], 64, 64, 4
        $region20: #{tpu_custom_call.1} parent=11 // pred_fallthru
          _
        // Predicated region
        $region21: #{tpu_custom_call.1} parent=11 // pred_check
          %p352 = pneg %p222
        $region22: #{tpu_custom_call.1} parent=11 // pred_check_branch
          %354 = sbr.rel (%p352) target = $region24
        $region23: #{tpu_custom_call.1} parent=11 // pred_region
          _
        $region24: #{tpu_custom_call.1} parent=11 // pred_fallthru
          _
        // Predicated region
        $region25: #{tpu_custom_call.1} parent=11 // pred_check
          %p355 = pneg %p243
        $region26: #{tpu_custom_call.1} parent=11 // pred_check_branch
          %357 = sbr.rel (%p355) target = $region28
        $region27: #{tpu_custom_call.1} parent=11 // pred_region
          _
        $region28: #{tpu_custom_call.1} parent=11 // pred_fallthru
          _
        // Predicated region
        $region29: #{tpu_custom_call.1} parent=11 // pred_check
          %p358 = pneg %p264
        $region30: #{tpu_custom_call.1} parent=11 // pred_check_branch
          %360 = sbr.rel (%p358) target = $region32
        $region31: #{tpu_custom_call.1} parent=11 // pred_region
          _
        $region32: #{tpu_custom_call.1} parent=11 // pred_fallthru
          _
        // Predicated region
        $region33: #{tpu_custom_call.1} parent=11 // pred_check
          %p361 = pneg %p285
        $region34: #{tpu_custom_call.1} parent=11 // pred_check_branch
          %363 = sbr.rel (%p361) target = $region36
        $region35: #{tpu_custom_call.1} parent=11 // pred_region
          _
        $region36: #{tpu_custom_call.1} parent=11 // pred_fallthru
          _
      $region12: #{tpu_custom_call.1} parent=5 // pred_fallthru
        _
      %p364 = scmp.lt.s32.totalorder %s29, 2
      // Predicated region
      $region37: #{tpu_custom_call.1} parent=5 // pred_check
        %p365 = pneg %p364
      $region38: #{tpu_custom_call.1} parent=5 // pred_check_branch
        %367 = sbr.rel (%p365) target = $region40
      $region39: #{tpu_custom_call.1} parent=5 // pred_region
        // Predicated region
        $region41: #{tpu_custom_call.1} parent=39 // pred_check
          %p368 = pneg %p49
        $region42: #{tpu_custom_call.1} parent=39 // pred_check_branch
          %370 = sbr.rel (%p368) target = $region44
        $region43: #{tpu_custom_call.1} parent=39 // pred_region
          %s371 = sand.u32 %s39, 1
          %s372 = scalar_lea.sflag [#allocation4], %s371
          %s373 = sand.u32 %s39, 1
          %s374 = smul.addr %s373, 4
          %s375 = scalar_lea.vmem [#allocation3], %s374
          %s377 = ssub.s32 64, 64
          %378 = vsyncadd %s372, %s377
          %s379 = smul.addr %s29, 64
          %s380 = scalar_lea.hbm %s0, %s379
          %s382 = sshll.u32 %s375, 4
          %s383 = int_to_ptr.vmem [resolvable:$true] %s382
          %385 = dma.hbm_to_vmem [thread:$0]  %s380, 64, %s383, %s372
        $region44: #{tpu_custom_call.1} parent=39 // pred_fallthru
          _
        // Predicated region
        $region45: #{tpu_custom_call.1} parent=39 // pred_check
          %p386 = pneg %p75
        $region46: #{tpu_custom_call.1} parent=39 // pred_check_branch
          %388 = sbr.rel (%p386) target = $region48
        $region47: #{tpu_custom_call.1} parent=39 // pred_region
          %s389 = sand.u32 %s29, 1
          %s390 = scalar_lea.sflag [#allocation7], %s389
          %s391 = sand.u32 %s65, 1
          %s392 = smul.addr %s391, 8
          %s393 = scalar_lea.vmem [#allocation6], %s392
          %s395 = ssub.s32 128, 128
          %396 = vsyncadd %s390, %s395
          %s397 = smul.addr %s29, 2
          %s398 = smul.addr %s397, 64
          %s399 = scalar_lea.hbm %s1, %s398
          %s400 = sshll.u32 %s393, 4
          %s401 = int_to_ptr.vmem [resolvable:$true] %s400
          %406 = dma.hbm_to_vmem [thread:$0]  %s399, 128, %s401, %s390, 64, 64, 4
        $region48: #{tpu_custom_call.1} parent=39 // pred_fallthru
          _
        // Predicated region
        $region49: #{tpu_custom_call.1} parent=39 // pred_check
          %p407 = pneg %p101
        $region50: #{tpu_custom_call.1} parent=39 // pred_check_branch
          %409 = sbr.rel (%p407) target = $region52
        $region51: #{tpu_custom_call.1} parent=39 // pred_region
          %s410 = sand.u32 %s29, 1
          %s411 = scalar_lea.sflag [#allocation7], %s410
          %s412 = sand.u32 %s91, 1
          %s413 = smul.addr %s412, 8
          %s414 = scalar_lea.vmem [#allocation8], %s413
          %s416 = ssub.s32 128, 128
          %417 = vsyncadd %s411, %s416
          %s418 = smul.addr %s29, 2
          %s419 = smul.addr %s418, 64
          %s420 = scalar_lea.hbm %s2, %s419
          %s421 = sshll.u32 %s414, 4
          %s422 = int_to_ptr.vmem [resolvable:$true] %s421
          %427 = dma.hbm_to_vmem [thread:$0]  %s420, 128, %s422, %s411, 64, 64, 4
        $region52: #{tpu_custom_call.1} parent=39 // pred_fallthru
          _
        // Predicated region
        $region53: #{tpu_custom_call.1} parent=39 // pred_check
          %p428 = pneg %p127
        $region54: #{tpu_custom_call.1} parent=39 // pred_check_branch
          %430 = sbr.rel (%p428) target = $region56
        $region55: #{tpu_custom_call.1} parent=39 // pred_region
          %p431 = scmp.lt.s32.totalorder %s29, 1
          %s432 = scalar_select %p431, %s29, 1
          %s433 = scalar_lea.vmem %s3, %s432
        $region56: #{tpu_custom_call.1} parent=39 // pred_fallthru
          _
        // Predicated region
        $region57: #{tpu_custom_call.1} parent=39 // pred_check
          %p434 = pneg %p153
        $region58: #{tpu_custom_call.1} parent=39 // pred_check_branch
          %436 = sbr.rel (%p434) target = $region60
        $region59: #{tpu_custom_call.1} parent=39 // pred_region
          %p437 = scmp.lt.s32.totalorder %s29, 1
          %s438 = scalar_select %p437, %s29, 1
          %s439 = scalar_lea.vmem %s4, %s438
        $region60: #{tpu_custom_call.1} parent=39 // pred_fallthru
          _
      $region40: #{tpu_custom_call.1} parent=5 // pred_fallthru
        _
      %p440 = scmp.le.s32.totalorder 1, %s29
      %p441 = scmp.lt.s32.totalorder %s29, 3
      %p442 = pnand %p440, %p441
      %p443 = pneg %p442
      // Predicated region
      $region61: #{tpu_custom_call.1} parent=5 // pred_check
        _
      $region62: #{tpu_custom_call.1} parent=5 // pred_check_branch
        %445 = sbr.rel (%p442) target = $region64
      $region63: #{tpu_custom_call.1} parent=5 // pred_region
        %s446 = ssub.s32 %s29, 1
        %s447 = sand.u32 %s42, 1
        %s448 = scalar_lea.sflag [#allocation4], %s447
        %s449 = sand.u32 %s42, 1
        %s450 = smul.addr %s449, 4
        %s451 = scalar_lea.vmem [#allocation3], %s450
        // Predicated region
        $region65: #{tpu_custom_call.1} parent=63 // pred_check
          %p452 = pneg %p55
        $region66: #{tpu_custom_call.1} parent=63 // pred_check_branch
          %454 = sbr.rel (%p452) target = $region68
        $region67: #{tpu_custom_call.1} parent=63 // pred_region
          %455 = dma.done %s448, 64
        $region68: #{tpu_custom_call.1} parent=63 // pred_fallthru
          _
        %s456 = sand.u32 %s34, 1
        %s457 = scalar_lea.sflag [#allocation7], %s456
        %s458 = sand.u32 %s68, 1
        %s459 = smul.addr %s458, 8
        %s460 = scalar_lea.vmem [#allocation6], %s459
        // Predicated region
        $region69: #{tpu_custom_call.1} parent=63 // pred_check
          %p461 = pneg %p81
        $region70: #{tpu_custom_call.1} parent=63 // pred_check_branch
          %463 = sbr.rel (%p461) target = $region72
        $region71: #{tpu_custom_call.1} parent=63 // pred_region
          %464 = dma.done %s457, 128
        $region72: #{tpu_custom_call.1} parent=63 // pred_fallthru
          _
        %s465 = sand.u32 %s34, 1
        %s466 = scalar_lea.sflag [#allocation7], %s465
        %s467 = sand.u32 %s94, 1
        %s468 = smul.addr %s467, 8
        %s469 = scalar_lea.vmem [#allocation8], %s468
        // Predicated region
        $region73: #{tpu_custom_call.1} parent=63 // pred_check
          %p470 = pneg %p107
        $region74: #{tpu_custom_call.1} parent=63 // pred_check_branch
          %472 = sbr.rel (%p470) target = $region76
        $region75: #{tpu_custom_call.1} parent=63 // pred_region
          %473 = dma.done %s466, 128
        $region76: #{tpu_custom_call.1} parent=63 // pred_fallthru
          _
        // Predicated region
        $region77: #{tpu_custom_call.1} parent=63 // pred_check
          %p474 = pneg %p180
        $region78: #{tpu_custom_call.1} parent=63 // pred_check_branch
          %476 = sbr.rel (%p474) target = $region80
        $region79: #{tpu_custom_call.1} parent=63 // pred_region
          %477 = dma.done [#allocation10], 3072
        $region80: #{tpu_custom_call.1} parent=63 // pred_fallthru
          _
        // Predicated region
        $region81: #{tpu_custom_call.1} parent=63 // pred_check
          %p478 = pneg %p201
        $region82: #{tpu_custom_call.1} parent=63 // pred_check_branch
          %480 = sbr.rel (%p478) target = $region84
        $region83: #{tpu_custom_call.1} parent=63 // pred_region
          %481 = dma.done [#allocation10], 1024
        $region84: #{tpu_custom_call.1} parent=63 // pred_fallthru
          _
        %s482 = sand.u32 %s42, 1
        %s483 = scalar_lea.sflag [#allocation4], %s482
        %s484 = sand.u32 %s42, 1
        %s485 = smul.addr %s484, 4
        %s486 = scalar_lea.vmem [#allocation3], %s485
        %p487 = pneg %p55
        %p488 = pneg %p52
        %s489 = sand.u32 %s34, 1
        %s490 = scalar_lea.sflag [#allocation7], %s489
        %s491 = sand.u32 %s68, 1
        %s492 = smul.addr %s491, 8
        %s493 = scalar_lea.vmem [#allocation6], %s492
        %p494 = pneg %p81
        %p495 = pneg %p78
        %s496 = sand.u32 %s34, 1
        %s497 = scalar_lea.sflag [#allocation7], %s496
        %s498 = sand.u32 %s94, 1
        %s499 = smul.addr %s498, 8
        %s500 = scalar_lea.vmem [#allocation8], %s499
        %p501 = pneg %p107
        %p502 = pneg %p104
        %p503 = scmp.lt.s32.totalorder %s34, 1
        %s504 = scalar_select %p503, %s34, 1
        %s505 = scalar_lea.vmem %s3, %s504
        %p506 = pneg %p133
        %p507 = pneg %p130
        %p508 = scmp.lt.s32.totalorder %s34, 1
        %s509 = scalar_select %p508, %s34, 1
        %s510 = scalar_lea.vmem %s4, %s509
        %p511 = pneg %p159
        %p512 = pneg %p156
        %p513 = pneg %p180
        %p514 = pneg %p177
        %p515 = pneg %p201
        %p516 = pneg %p198
        %p517 = pneg %p222
        %p518 = pneg %p219
        %p519 = pneg %p243
        %p520 = pneg %p240
        %p521 = pneg %p264
        %p522 = pneg %p261
        %p523 = pneg %p285
        %p524 = pneg %p282
        %p525 = pneg %p311
        %p526 = pneg %p308
        %s527 = sand.u32 %s298, 1
        %s528 = scalar_lea.sflag [#allocation5], %s527
        %s529 = sand.u32 %s298, 1
        %s530 = smul.addr %s529, 8
        %s531 = scalar_lea.vmem [#allocation12], %s530
        %p532 = scmp.lt.s32.totalorder %s34, 1
        %s533 = scalar_select %p532, %s34, 1
        %s534 = scalar_lea.vmem %s3, %s533
        %p535 = scmp.lt.s32.totalorder %s34, 1
        %s536 = scalar_select %p535, %s34, 1
        %s537 = scalar_lea.vmem %s4, %s536
        %v539 = vld [vmem:[%s451] sm:$0xf]
        %v540 = vld [vmem:[#allocation9] sm:$0xff]
        %v541 = vld [vmem:[#allocation9 + $0x8] sm:$0xf]
        %v542 = vld [vmem:[#allocation9 + $0xc] sm:$0xff]
        %v543 = vld [vmem:[#allocation9 + $0x14] sm:$0xf]
        %v544 = vld [vmem:[#allocation9 + $0x18] sm:$0xff]
        %v545 = vld [vmem:[#allocation9 + $0x20] sm:$0xf]
        %v546 = vld [vmem:[#allocation9 + $0x24] sm:$0xff]
        %v547 = vld [vmem:[#allocation9 + $0x2c] sm:$0xf]
        %v548 = vld [vmem:[#allocation9 + $0x30] sm:$0xff]
        %v549 = vld [vmem:[#allocation9 + $0x38] sm:$0xf]
        %v550 = vld [vmem:[#allocation9 + $0x3c] sm:$0xff]
        %v551 = vld [vmem:[#allocation9 + $0x44] sm:$0xf]
        %v552 = vld [vmem:[#allocation9 + $0x48] sm:$0xff]
        %v553 = vld [vmem:[#allocation9 + $0x50] sm:$0xf]
        %v554 = vld [vmem:[#allocation9 + $0x54] sm:$0xff]
        %v555 = vld [vmem:[#allocation9 + $0x5c] sm:$0xf]
        %v556 = vld [vmem:[#allocation9 + $0x60] sm:$0xff]
        %v557 = vld [vmem:[#allocation9 + $0x68] sm:$0xf]
        %v558 = vld [vmem:[#allocation9 + $0x6c] sm:$0xff]
        %v559 = vld [vmem:[#allocation9 + $0x74] sm:$0xf]
        %v560 = vld [vmem:[#allocation9 + $0x78] sm:$0xff]
        %v561 = vld [vmem:[#allocation9 + $0x80] sm:$0xf]
        %v562 = vld [vmem:[#allocation9 + $0x84] sm:$0xff]
        %v563 = vld [vmem:[#allocation9 + $0x8c] sm:$0xf]
        %v564 = vld [vmem:[#allocation9 + $0x90] sm:$0xff]
        %v565 = vld [vmem:[#allocation9 + $0x98] sm:$0xf]
        %v566 = vld [vmem:[#allocation9 + $0x9c] sm:$0xff]
        %v567 = vld [vmem:[#allocation9 + $0xa4] sm:$0xf]
        %v568 = vld [vmem:[#allocation9 + $0xa8] sm:$0xff]
        %v569 = vld [vmem:[#allocation9 + $0xb0] sm:$0xf]
        %v570 = vld [vmem:[#allocation9 + $0xb4] sm:$0xff]
        %v571 = vld [vmem:[#allocation9 + $0xbc] sm:$0xf]
        %v604 = vunpack.c.l.b16 %v540
        %v605 = vunpack.c.h.b16 %v540
        %v606 = vunpack.c.l.b16 %v541
        %v607 = vunpack.c.l.b16 %v542
        %v608 = vunpack.c.h.b16 %v542
        %v609 = vunpack.c.l.b16 %v543
        %v610 = vunpack.c.l.b16 %v544
        %v611 = vunpack.c.h.b16 %v544
        %v612 = vunpack.c.l.b16 %v545
        %v613 = vunpack.c.l.b16 %v546
        %v614 = vunpack.c.h.b16 %v546
        %v615 = vunpack.c.l.b16 %v547
        %v616 = vunpack.c.l.b16 %v548
        %v617 = vunpack.c.h.b16 %v548
        %v618 = vunpack.c.l.b16 %v549
        %v619 = vunpack.c.l.b16 %v550
        %v620 = vunpack.c.h.b16 %v550
        %v621 = vunpack.c.l.b16 %v551
        %v622 = vunpack.c.l.b16 %v552
        %v623 = vunpack.c.h.b16 %v552
        %v624 = vunpack.c.l.b16 %v553
        %v625 = vunpack.c.l.b16 %v554
        %v626 = vunpack.c.h.b16 %v554
        %v627 = vunpack.c.l.b16 %v555
        %v628 = vunpack.c.l.b16 %v556
        %v629 = vunpack.c.h.b16 %v556
        %v630 = vunpack.c.l.b16 %v557
        %v631 = vunpack.c.l.b16 %v558
        %v632 = vunpack.c.h.b16 %v558
        %v633 = vunpack.c.l.b16 %v559
        %v634 = vunpack.c.l.b16 %v560
        %v635 = vunpack.c.h.b16 %v560
        %v636 = vunpack.c.l.b16 %v561
        %v637 = vunpack.c.l.b16 %v562
        %v638 = vunpack.c.h.b16 %v562
        %v639 = vunpack.c.l.b16 %v563
        %v640 = vunpack.c.l.b16 %v564
        %v641 = vunpack.c.h.b16 %v564
        %v642 = vunpack.c.l.b16 %v565
        %v643 = vunpack.c.l.b16 %v566
        %v644 = vunpack.c.h.b16 %v566
        %v645 = vunpack.c.l.b16 %v567
        %v646 = vunpack.c.l.b16 %v568
        %v647 = vunpack.c.h.b16 %v568
        %v648 = vunpack.c.l.b16 %v569
        %v649 = vunpack.c.l.b16 %v570
        %v650 = vunpack.c.h.b16 %v570
        %v651 = vunpack.c.l.b16 %v571
        %v652 = vpack.c.b16 %v607, %v604
        %v653 = vpack.c.b16 %v608, %v605
        %v654 = vpack.c.b16 %v609, %v606
        %v655 = vpack.c.b16 %v613, %v610
        %v656 = vpack.c.b16 %v614, %v611
        %v657 = vpack.c.b16 %v615, %v612
        %v658 = vpack.c.b16 %v619, %v616
        %v659 = vpack.c.b16 %v620, %v617
        %v660 = vpack.c.b16 %v621, %v618
        %v661 = vpack.c.b16 %v625, %v622
        %v662 = vpack.c.b16 %v626, %v623
        %v663 = vpack.c.b16 %v627, %v624
        %v664 = vpack.c.b16 %v631, %v628
        %v665 = vpack.c.b16 %v632, %v629
        %v666 = vpack.c.b16 %v633, %v630
        %v667 = vpack.c.b16 %v637, %v634
        %v668 = vpack.c.b16 %v638, %v635
        %v669 = vpack.c.b16 %v639, %v636
        %v670 = vpack.c.b16 %v643, %v640
        %v671 = vpack.c.b16 %v644, %v641
        %v672 = vpack.c.b16 %v645, %v642
        %v673 = vpack.c.b16 %v649, %v646
        %v674 = vpack.c.b16 %v650, %v647
        %v675 = vpack.c.b16 %v651, %v648
        %700 = vmatprep.subr.bf16.mxu0 %v653
        %701 = vmatpush1.bf16.msra.mxu0 %v652
        %702 = vmatprep.subr.bf16.mxu0 %v656
        %703 = vmatpush1.bf16.msra.mxu0 %v655
        %704 = vmatprep.subr.bf16.mxu0 %v659
        %705 = vmatpush1.bf16.msra.mxu0 %v658
        %706 = vmatprep.subr.bf16.mxu0 %v662
        %707 = vmatpush1.bf16.msra.mxu0 %v661
        %708 = vmatprep.subr.bf16.mxu0 %v665
        %709 = vmatpush1.bf16.msra.mxu0 %v664
        %710 = vmatprep.subr.bf16.mxu0 %v668
        %711 = vmatpush1.bf16.msra.mxu0 %v667
        %712 = vmatprep.subr.bf16.mxu0 %v671
        %713 = vmatpush1.bf16.msra.mxu0 %v670
        %714 = vmatprep.subr.bf16.mxu0 %v674
        %715 = vmatpush1.bf16.msra.mxu0 %v673
        %716 = vmatprep.subr.bf16.mxu0 0
        %717 = vmatpush1.bf16.msra.mxu0 0
        %718 = vmatprep.subr.bf16.mxu0 0
        %719 = vmatpush1.bf16.msra.mxu0 0
        %720 = vmatprep.subr.bf16.mxu0 0
        %721 = vmatpush1.bf16.msra.mxu0 0
        %722 = vmatprep.subr.bf16.mxu0 0
        %723 = vmatpush1.bf16.msra.mxu0 0
        %724 = vmatprep.subr.bf16.mxu0 0
        %725 = vmatpush1.bf16.msra.mxu0 0
        %726 = vmatprep.subr.bf16.mxu0 0
        %727 = vmatpush1.bf16.msra.mxu0 0
        %728 = vmatprep.subr.bf16.mxu0 0
        %729 = vmatpush1.bf16.msra.mxu0 0
        %730 = vmatprep.subr.bf16.mxu0 0
        %731 = vmatpush1.bf16.msra.mxu0 0
        %732 = vmatprep.mubr.bf16.mxu0 0
        %733 = vmatmul.mubr.bf16.gmra.mrb[0].mxu0 %v539
        %v734 = vpop.f32.mrb[0].mxu0
        %v735 = vadd.f32 0.0, %v734
        %v736 = vpop.f32.mrb[0].mxu0
        %v737 = vadd.f32 0.0, %v736
        %v738 = vpop.f32.mrb[0].mxu0
        %v739 = vpop.f32.mrb[0].mxu0
        %740 = vdwg.mxu0
        %741 = vmatprep.subr.bf16.mxu0 0
        %742 = vmatpush1.bf16.msra.mxu0 %v654
        %743 = vmatprep.subr.bf16.mxu0 0
        %744 = vmatpush1.bf16.msra.mxu0 %v657
        %745 = vmatprep.subr.bf16.mxu0 0
        %746 = vmatpush1.bf16.msra.mxu0 %v660
        %747 = vmatprep.subr.bf16.mxu0 0
        %748 = vmatpush1.bf16.msra.mxu0 %v663
        %749 = vmatprep.subr.bf16.mxu0 0
        %750 = vmatpush1.bf16.msra.mxu0 %v666
        %751 = vmatprep.subr.bf16.mxu0 0
        %752 = vmatpush1.bf16.msra.mxu0 %v669
        %753 = vmatprep.subr.bf16.mxu0 0
        %754 = vmatpush1.bf16.msra.mxu0 %v672
        %755 = vmatprep.subr.bf16.mxu0 0
        %756 = vmatpush1.bf16.msra.mxu0 %v675
        %757 = vmatprep.subr.bf16.mxu0 0
        %758 = vmatpush1.bf16.msra.mxu0 0
        %759 = vmatprep.subr.bf16.mxu0 0
        %760 = vmatpush1.bf16.msra.mxu0 0
        %761 = vmatprep.subr.bf16.mxu0 0
        %762 = vmatpush1.bf16.msra.mxu0 0
        %763 = vmatprep.subr.bf16.mxu0 0
        %764 = vmatpush1.bf16.msra.mxu0 0
        %765 = vmatprep.subr.bf16.mxu0 0
        %766 = vmatpush1.bf16.msra.mxu0 0
        %767 = vmatprep.subr.bf16.mxu0 0
        %768 = vmatpush1.bf16.msra.mxu0 0
        %769 = vmatprep.subr.bf16.mxu0 0
        %770 = vmatpush1.bf16.msra.mxu0 0
        %771 = vmatprep.subr.bf16.mxu0 0
        %772 = vmatpush1.bf16.msra.mxu0 0
        %773 = vmatprep.mubr.bf16.mxu0 0
        %774 = vmatmul.mubr.bf16.gmra.mrb[0].mxu0 %v539
        %v775 = vpop.f32.mrb[0].mxu0
        %v776 = vadd.f32 0.0, %v775
        %v777 = vpop.f32.mrb[0].mxu0
        %v778 = vpop.f32.mrb[0].mxu0
        %v779 = vpop.f32.mrb[0].mxu0
        %780 = vdwg.mxu0
        %v781 = vmul.f32 %v735, 0.088388346
        %v782 = vpack.c.bf16 %v781, %v781
        %v783 = vpack.c.bf16 %v737, %v737
        %v784 = vpack.c.bf16 %v776, %v776
        %v785 = vld [vmem:[%s534] sm:$0x1]
        %vm786 = vcmp.gt.s32.totalorder %v785, 0
        %v787 = vld [vmem:[%s460] sm:$0xf]
        %v788 = vld [vmem:[%s460 + $0x4] sm:$0xf]
        %v791 = vunpack.c.l.b16 %v787
        %v792 = vunpack.c.l.b16 %v788
        %v793 = vpack.c.b16 %v792, %v791
        %795 = vmatprep.subr.bf16.mxu0 0
        %796 = vmatpush1.bf16.xpose.msra.mxu0 %v793
        %797 = vmatprep.subr.bf16.mxu0 0
        %798 = vmatpush1.bf16.xpose.msra.mxu0 0
        %799 = vmatprep.subr.bf16.mxu0 0
        %800 = vmatpush1.bf16.xpose.msra.mxu0 0
        %801 = vmatprep.subr.bf16.mxu0 0
        %802 = vmatpush1.bf16.xpose.msra.mxu0 0
        %803 = vmatprep.subr.bf16.mxu0 0
        %804 = vmatpush1.bf16.xpose.msra.mxu0 0
        %805 = vmatprep.subr.bf16.mxu0 0
        %806 = vmatpush1.bf16.xpose.msra.mxu0 0
        %807 = vmatprep.subr.bf16.mxu0 0
        %808 = vmatpush1.bf16.xpose.msra.mxu0 0
        %809 = vmatprep.subr.bf16.mxu0 0
        %810 = vmatpush1.bf16.xpose.msra.mxu0 0
        %811 = vmatprep.subr.bf16.mxu0 0
        %812 = vmatpush1.bf16.xpose.msra.mxu0 0
        %813 = vmatprep.subr.bf16.mxu0 0
        %814 = vmatpush1.bf16.xpose.msra.mxu0 0
        %815 = vmatprep.subr.bf16.mxu0 0
        %816 = vmatpush1.bf16.xpose.msra.mxu0 0
        %817 = vmatprep.subr.bf16.mxu0 0
        %818 = vmatpush1.bf16.xpose.msra.mxu0 0
        %819 = vmatprep.subr.bf16.mxu0 0
        %820 = vmatpush1.bf16.xpose.msra.mxu0 0
        %821 = vmatprep.subr.bf16.mxu0 0
        %822 = vmatpush1.bf16.xpose.msra.mxu0 0
        %823 = vmatprep.subr.bf16.mxu0 0
        %824 = vmatpush1.bf16.xpose.msra.mxu0 0
        %825 = vmatprep.subr.bf16.mxu0 0
        %826 = vmatpush1.bf16.xpose.msra.mxu0 0
        %827 = vmatprep.mubr.bf16.mxu0 0
        %828 = vmatmul.mubr.bf16.gmra.mrb[0].mxu0 %v782
        %v829 = vpop.f32.mrb[0].mxu0
        %v830 = vadd.f32 0.0, %v829
        %v831 = vpop.f32.mrb[0].mxu0
        %v832 = vpop.f32.mrb[0].mxu0
        %v833 = vpop.f32.mrb[0].mxu0
        %834 = vdwg.mxu0
        %835 = vmatprep.subr.bf16.mxu0 0
        %836 = vmatpush1.bf16.xpose.msra.mxu0 %v783
        %837 = vmatprep.subr.bf16.mxu0 0
        %838 = vmatpush1.bf16.xpose.msra.mxu0 0
        %839 = vmatprep.subr.bf16.mxu0 0
        %840 = vmatpush1.bf16.xpose.msra.mxu0 0
        %841 = vmatprep.subr.bf16.mxu0 0
        %842 = vmatpush1.bf16.xpose.msra.mxu0 0
        %843 = vmatprep.subr.bf16.mxu0 0
        %844 = vmatpush1.bf16.xpose.msra.mxu0 0
        %845 = vmatprep.subr.bf16.mxu0 0
        %846 = vmatpush1.bf16.xpose.msra.mxu0 0
        %847 = vmatprep.subr.bf16.mxu0 0
        %848 = vmatpush1.bf16.xpose.msra.mxu0 0
        %849 = vmatprep.subr.bf16.mxu0 0
        %850 = vmatpush1.bf16.xpose.msra.mxu0 0
        %851 = vmatprep.subr.bf16.mxu0 0
        %852 = vmatpush1.bf16.xpose.msra.mxu0 0
        %853 = vmatprep.subr.bf16.mxu0 0
        %854 = vmatpush1.bf16.xpose.msra.mxu0 0
        %855 = vmatprep.subr.bf16.mxu0 0
        %856 = vmatpush1.bf16.xpose.msra.mxu0 0
        %857 = vmatprep.subr.bf16.mxu0 0
        %858 = vmatpush1.bf16.xpose.msra.mxu0 0
        %859 = vmatprep.subr.bf16.mxu0 0
        %860 = vmatpush1.bf16.xpose.msra.mxu0 0
        %861 = vmatprep.subr.bf16.mxu0 0
        %862 = vmatpush1.bf16.xpose.msra.mxu0 0
        %863 = vmatprep.subr.bf16.mxu0 0
        %864 = vmatpush1.bf16.xpose.msra.mxu0 0
        %865 = vmatprep.subr.bf16.mxu0 0
        %866 = vmatpush1.bf16.xpose.msra.mxu0 0
        %867 = vmatprep.mubr.bf16.mxu0 0
        %868 = vmatmul.mubr.bf16.gmra.mrb[0].mxu0 %v782
        %v869 = vpop.f32.mrb[0].mxu0
        %v870 = vadd.f32 0.0, %v869
        %v871 = vpop.f32.mrb[0].mxu0
        %v872 = vpop.f32.mrb[0].mxu0
        %v873 = vpop.f32.mrb[0].mxu0
        %874 = vdwg.mxu0
        %v875 = vlaneseq
        %v876 = vshrl.u32 %v875, 7
        %v877 = vlaneseq
        %v878 = vand.u32 %v877, 127
        %v879 = vsel %vm786, 1, 0
        %v880 = vlaneseq
        %v881 = vshrl.u32 %v880, 7
        %v882 = vsub.s32 0, %v881
        %v883 = vrot.slane %v879, %v882
        %vm884 = vcmp.eq.s32.totalorder %v883, 1
        %v885 = vsel %vm884, %v830, -1e+09
        %vm886 = vcmp.le.s32.totalorder %v878, %v876
        %v887 = vsel %vm886, 1, 0
        %888 = vrot.lane.b32.xlu0 %v887, 16
        %v889 = vpop.permute.xlu0 %888
        %vm890 = vcmp.ne.s32.totalorder %v889, 0
        %vm891 = vmand %vm884, %vm890
        %893 = vrot.lane.b32.xlu0 %v870, 16
        %v894 = vpop.permute.xlu0 %893
        %v896 = vsel %vm891, %v894, -1e+09
        %vm897 = vcmask 130048
        %v898 = vsel %vm897, %v885, -inf
        %899 = vmax.xlane.f32.xlu0 %v898
        %v900 = vpop.xlane.xlu0 %899
        %vm901 = vcmask 195712
        %v902 = vsel %vm901, %v896, -inf
        %903 = vmax.xlane.f32.xlu0 %v902
        %v904 = vpop.xlane.xlu0 %903
        %v905 = vmax.f32 %v900, %v904
        %v906 = vsub.f32 %v885, %v905
        %v907 = vmul.f32 %v906, 1.442695
        %v908 = vpow.pop %v907
        %v909 = vsub.f32 %v896, %v905
        %v910 = vmul.f32 %v909, 1.442695
        %v911 = vpow.pop %v910
        %v912 = vsel %vm897, %v908, 0.0
        %913 = vadd.xlane.f32.xlu0 %v912
        %v914 = vpop.xlane.xlu0 %913
        %916 = vrot.lane.b32.xlu0 %v911, 112
        %v917 = vpop.permute.xlu0 %916
        %vm919 = vcmask 64512
        %v920 = vsel %vm919, %v917, 0.0
        %921 = vadd.xlane.f32.xlu0 %v920
        %v922 = vpop.xlane.xlu0 %921
        %v923 = vadd.f32 %v914, %v922
        %v924 = vpack.c.bf16 %v908, %v908
        %v925 = vld [vmem:[%s469] sm:$0xf]
        %v926 = vld [vmem:[%s469 + $0x4] sm:$0xf]
        %v927 = vpack.c.bf16 %v911, %v911
        %929 = vrot.lane.b32.xlu0 %v927, 112
        %v930 = vpop.permute.xlu0 %929
        %v932 = vsel %vm919, %v930, 0
        %vm934 = vcmask 1043456
        %v936 = vsel %vm934, %v784, 0
        %938 = vmatprep.subr.bf16.mxu0 0
        %939 = vmatpush1.bf16.msra.mxu0 %v936
        %940 = vmatprep.subr.bf16.mxu0 0
        %941 = vmatpush1.bf16.msra.mxu0 0
        %942 = vmatprep.subr.bf16.mxu0 0
        %943 = vmatpush1.bf16.msra.mxu0 0
        %944 = vmatprep.subr.bf16.mxu0 0
        %945 = vmatpush1.bf16.msra.mxu0 0
        %946 = vmatprep.subr.bf16.mxu0 0
        %947 = vmatpush1.bf16.msra.mxu0 0
        %948 = vmatprep.subr.bf16.mxu0 0
        %949 = vmatpush1.bf16.msra.mxu0 0
        %950 = vmatprep.subr.bf16.mxu0 0
        %951 = vmatpush1.bf16.msra.mxu0 0
        %952 = vmatprep.subr.bf16.mxu0 0
        %953 = vmatpush1.bf16.msra.mxu0 0
        %954 = vmatprep.subr.bf16.mxu0 0
        %955 = vmatpush1.bf16.msra.mxu0 0
        %956 = vmatprep.subr.bf16.mxu0 0
        %957 = vmatpush1.bf16.msra.mxu0 0
        %958 = vmatprep.subr.bf16.mxu0 0
        %959 = vmatpush1.bf16.msra.mxu0 0
        %960 = vmatprep.subr.bf16.mxu0 0
        %961 = vmatpush1.bf16.msra.mxu0 0
        %962 = vmatprep.subr.bf16.mxu0 0
        %963 = vmatpush1.bf16.msra.mxu0 0
        %964 = vmatprep.subr.bf16.mxu0 0
        %965 = vmatpush1.bf16.msra.mxu0 0
        %966 = vmatprep.subr.bf16.mxu0 0
        %967 = vmatpush1.bf16.msra.mxu0 0
        %968 = vmatprep.subr.bf16.mxu0 0
        %969 = vmatpush1.bf16.msra.mxu0 0
        %970 = vmatprep.mubr.bf16.mxu0 0
        %971 = vmatmul.mubr.bf16.gmra.mrb[0].mxu0 %v932
        %v972 = vpop.f32.mrb[0].mxu0
        %v973 = vadd.f32 0.0, %v972
        %v974 = vpop.f32.mrb[0].mxu0
        %v975 = vpop.f32.mrb[0].mxu0
        %v976 = vpop.f32.mrb[0].mxu0
        %977 = vdwg.mxu0
        %v980 = vunpack.c.l.b16 %v925
        %v981 = vunpack.c.l.b16 %v926
        %v982 = vpack.c.b16 %v981, %v980
        %v985 = vsel %vm897, %v924, 0
        %987 = vmatprep.subr.bf16.mxu0 0
        %988 = vmatpush1.bf16.msra.mxu0 %v982
        %989 = vmatprep.subr.bf16.mxu0 0
        %990 = vmatpush1.bf16.msra.mxu0 0
        %991 = vmatprep.subr.bf16.mxu0 0
        %992 = vmatpush1.bf16.msra.mxu0 0
        %993 = vmatprep.subr.bf16.mxu0 0
        %994 = vmatpush1.bf16.msra.mxu0 0
        %995 = vmatprep.subr.bf16.mxu0 0
        %996 = vmatpush1.bf16.msra.mxu0 0
        %997 = vmatprep.subr.bf16.mxu0 0
        %998 = vmatpush1.bf16.msra.mxu0 0
        %999 = vmatprep.subr.bf16.mxu0 0
        %1000 = vmatpush1.bf16.msra.mxu0 0
        %1001 = vmatprep.subr.bf16.mxu0 0
        %1002 = vmatpush1.bf16.msra.mxu0 0
        %1003 = vmatprep.subr.bf16.mxu0 0
        %1004 = vmatpush1.bf16.msra.mxu0 0
        %1005 = vmatprep.subr.bf16.mxu0 0
        %1006 = vmatpush1.bf16.msra.mxu0 0
        %1007 = vmatprep.subr.bf16.mxu0 0
        %1008 = vmatpush1.bf16.msra.mxu0 0
        %1009 = vmatprep.subr.bf16.mxu0 0
        %1010 = vmatpush1.bf16.msra.mxu0 0
        %1011 = vmatprep.subr.bf16.mxu0 0
        %1012 = vmatpush1.bf16.msra.mxu0 0
        %1013 = vmatprep.subr.bf16.mxu0 0
        %1014 = vmatpush1.bf16.msra.mxu0 0
        %1015 = vmatprep.subr.bf16.mxu0 0
        %1016 = vmatpush1.bf16.msra.mxu0 0
        %1017 = vmatprep.subr.bf16.mxu0 0
        %1018 = vmatpush1.bf16.msra.mxu0 0
        %1019 = vmatprep.mubr.bf16.mxu0 0
        %1020 = vmatmul.mubr.bf16.gmra.mrb[0].mxu0 %v985
        %v1021 = vpop.f32.mrb[0].mxu0
        %v1022 = vadd.f32 %v973, %v1021
        %v1023 = vpop.f32.mrb[0].mxu0
        %v1024 = vpop.f32.mrb[0].mxu0
        %v1025 = vpop.f32.mrb[0].mxu0
        %1026 = vdwg.mxu0
        %v1027 = vrcp.pop %v923
        %v1028 = vmul.f32 %v1022, %v1027
        %v1029 = vpack.c.bf16 %v1028, %v1028
        %v1030 = vld [vmem:[#allocation11] sm:$0xf]
        %v1031 = vld [vmem:[#allocation11 + $0x4] sm:$0xf]
        %v1032 = vld [vmem:[#allocation11 + $0x8] sm:$0xf]
        %v1033 = vld [vmem:[#allocation11 + $0xc] sm:$0xf]
        %v1034 = vld [vmem:[#allocation11 + $0x10] sm:$0xf]
        %v1035 = vld [vmem:[#allocation11 + $0x14] sm:$0xf]
        %v1036 = vld [vmem:[#allocation11 + $0x18] sm:$0xf]
        %v1037 = vld [vmem:[#allocation11 + $0x1c] sm:$0xf]
        %v1038 = vld [vmem:[#allocation11 + $0x20] sm:$0xf]
        %v1039 = vld [vmem:[#allocation11 + $0x24] sm:$0xf]
        %v1040 = vld [vmem:[#allocation11 + $0x28] sm:$0xf]
        %v1041 = vld [vmem:[#allocation11 + $0x2c] sm:$0xf]
        %v1042 = vld [vmem:[#allocation11 + $0x30] sm:$0xf]
        %v1043 = vld [vmem:[#allocation11 + $0x34] sm:$0xf]
        %v1044 = vld [vmem:[#allocation11 + $0x38] sm:$0xf]
        %v1045 = vld [vmem:[#allocation11 + $0x3c] sm:$0xf]
        %v1062 = vunpack.c.l.b16 %v1030
        %v1063 = vunpack.c.l.b16 %v1031
        %v1064 = vunpack.c.l.b16 %v1032
        %v1065 = vunpack.c.l.b16 %v1033
        %v1066 = vunpack.c.l.b16 %v1034
        %v1067 = vunpack.c.l.b16 %v1035
        %v1068 = vunpack.c.l.b16 %v1036
        %v1069 = vunpack.c.l.b16 %v1037
        %v1070 = vunpack.c.l.b16 %v1038
        %v1071 = vunpack.c.l.b16 %v1039
        %v1072 = vunpack.c.l.b16 %v1040
        %v1073 = vunpack.c.l.b16 %v1041
        %v1074 = vunpack.c.l.b16 %v1042
        %v1075 = vunpack.c.l.b16 %v1043
        %v1076 = vunpack.c.l.b16 %v1044
        %v1077 = vunpack.c.l.b16 %v1045
        %v1078 = vpack.c.b16 %v1063, %v1062
        %v1079 = vpack.c.b16 %v1065, %v1064
        %v1080 = vpack.c.b16 %v1067, %v1066
        %v1081 = vpack.c.b16 %v1069, %v1068
        %v1082 = vpack.c.b16 %v1071, %v1070
        %v1083 = vpack.c.b16 %v1073, %v1072
        %v1084 = vpack.c.b16 %v1075, %v1074
        %v1085 = vpack.c.b16 %v1077, %v1076
        %1094 = vmatprep.subr.bf16.mxu0 0
        %1095 = vmatpush1.bf16.msra.mxu0 %v1078
        %1096 = vmatprep.subr.bf16.mxu0 0
        %1097 = vmatpush1.bf16.msra.mxu0 %v1079
        %1098 = vmatprep.subr.bf16.mxu0 0
        %1099 = vmatpush1.bf16.msra.mxu0 %v1080
        %1100 = vmatprep.subr.bf16.mxu0 0
        %1101 = vmatpush1.bf16.msra.mxu0 %v1081
        %1102 = vmatprep.subr.bf16.mxu0 0
        %1103 = vmatpush1.bf16.msra.mxu0 %v1082
        %1104 = vmatprep.subr.bf16.mxu0 0
        %1105 = vmatpush1.bf16.msra.mxu0 %v1083
        %1106 = vmatprep.subr.bf16.mxu0 0
        %1107 = vmatpush1.bf16.msra.mxu0 %v1084
        %1108 = vmatprep.subr.bf16.mxu0 0
        %1109 = vmatpush1.bf16.msra.mxu0 %v1085
        %1110 = vmatprep.subr.bf16.mxu0 0
        %1111 = vmatpush1.bf16.msra.mxu0 0
        %1112 = vmatprep.subr.bf16.mxu0 0
        %1113 = vmatpush1.bf16.msra.mxu0 0
        %1114 = vmatprep.subr.bf16.mxu0 0
        %1115 = vmatpush1.bf16.msra.mxu0 0
        %1116 = vmatprep.subr.bf16.mxu0 0
        %1117 = vmatpush1.bf16.msra.mxu0 0
        %1118 = vmatprep.subr.bf16.mxu0 0
        %1119 = vmatpush1.bf16.msra.mxu0 0
        %1120 = vmatprep.subr.bf16.mxu0 0
        %1121 = vmatpush1.bf16.msra.mxu0 0
        %1122 = vmatprep.subr.bf16.mxu0 0
        %1123 = vmatpush1.bf16.msra.mxu0 0
        %1124 = vmatprep.subr.bf16.mxu0 0
        %1125 = vmatpush1.bf16.msra.mxu0 0
        %1126 = vmatprep.mubr.bf16.mxu0 0
        %1127 = vmatmul.mubr.bf16.gmra.mrb[0].mxu0 %v1029
        %v1128 = vpop.f32.mrb[0].mxu0
        %v1129 = vadd.f32 0.0, %v1128
        %v1130 = vpop.f32.mrb[0].mxu0
        %v1131 = vpop.f32.mrb[0].mxu0
        %v1132 = vpop.f32.mrb[0].mxu0
        %1133 = vdwg.mxu0
        %v1134 = vunpack.c.l.bf16 %v539
        %v1135 = vadd.f32 %v1134, %v1129
        %1136 = vadd.xlane.f32.xlu0 %v1135
        %v1137 = vpop.xlane.xlu0 %1136
        %v1138 = vrcp.pop 128.0
        %v1139 = vmul.f32 %v1137, %v1138
        %v1140 = vsub.f32 %v1135, %v1139
        %v1141 = vmul.f32 %v1140, %v1140
        %1142 = vadd.xlane.f32.xlu0 %v1141
        %v1143 = vpop.xlane.xlu0 %1142
        %v1144 = vmul.f32 %v1143, %v1138
        %v1145 = vadd.f32 %v1144, 1e-05
        %v1146 = vrsqrt.pop %v1145
        %v1147 = vmul.f32 %v1140, %v1146
        %v1148 = vld [vmem:[%s7] sm:$0x1]
        %v1150 = vlaneseq
        %v1151 = vshrl.u32 %v1150, 7
        %v1152 = vsub.s32 0, %v1151
        %v1153 = vrot.slane %v1148, %v1152
        %v1155 = vmul.f32 %v1147, %v1153
        %v1156 = vld [vmem:[%s8] sm:$0x1]
        %v1158 = vlaneseq
        %v1159 = vshrl.u32 %v1158, 7
        %v1160 = vsub.s32 0, %v1159
        %v1161 = vrot.slane %v1156, %v1160
        %v1163 = vadd.f32 %v1155, %v1161
        %v1164 = vld [vmem:[%s9] sm:$0x1]
        %v1166 = vlaneseq
        %v1167 = vshrl.u32 %v1166, 7
        %v1168 = vsub.s32 0, %v1167
        %v1169 = vrot.slane %v1164, %v1168
        %v1171 = vmul.f32 %v1163, %v1169
        %1172 = vadd.xlane.f32.xlu0 %v1171
        %v1173 = vpop.xlane.xlu0 %1172
        %v1174 = vld [vmem:[#allocation2] sm:$0x1]
        %1176 = vset.pattern.permute.xlu0 0
        %1177 = vperm.xlu0 %1176, %v1174
        %v1178 = vpop.permute.xlu0 %1177
        %v1180 = vlaneseq
        %v1181 = vshrl.u32 %v1180, 7
        %v1182 = vsub.s32 0, %v1181
        %v1183 = vrot.slane %v1178, %v1182
        %v1184 = vadd.f32 %v1173, %v1183
        %v1185 = vld [vmem:[%s537] sm:$0x1]
        %v1186 = vcvt.s32.f32 %v879
        %v1187 = vmax.f32 %v1184, 0.0
        %1189 = vset.pattern.permute.xlu0 0
        %1190 = vperm.xlu0 %1189, %v1185
        %v1191 = vpop.permute.xlu0 %1190
        %v1193 = vlaneseq
        %v1194 = vshrl.u32 %v1193, 7
        %v1195 = vsub.s32 0, %v1194
        %v1196 = vrot.slane %v1191, %v1195
        %v1197 = vmul.f32 %v1184, %v1196
        %v1198 = vsub.f32 %v1187, %v1197
        %v1199 = vand.u32 2147483647, %v1184
        %v1200 = vsub.f32 0.0, %v1199
        %v1201 = vmul.f32 %v1200, 1.442695
        %v1202 = vpow.pop %v1201
        %v1203 = vadd.f32 %v1202, 1.0
        %v1204 = vlog2.pop %v1203
        %v1205 = vmul.f32 %v1204, 0.6931472
        %v1206 = vadd.f32 %v1198, %v1205
        %vm1207 = vcmp.ge.f32.partialorder %v1184, 0.5
        %v1208 = vsel %vm1207, 1, 0
        %v1209 = vcvt.s32.f32 %v1208
        %vm1210 = vcmp.eq.f32.partialorder %v1209, %v1196
        %v1211 = vsel %vm1210, 1, 0
        %v1212 = vcvt.s32.f32 %v1211
        %v1214 = vlaneseq
        %v1215 = vshrl.u32 %v1214, 7
        %v1216 = vsub.s32 0, %v1215
        %v1217 = vrot.slane %v1186, %v1216
        %s1219 = sor.u32 256, 16
        %1220 = vbcast.lane.b32.xlu0 %v1217, %s1219
        %v1221 = vpop.permute.xlu0 %1220
        %v1223 = vmul.f32 %v1206, %v1221
        %1225 = vset.pattern.permute.xlu0 0
        %1226 = vperm.xlu0 %1225, %v1223
        %v1227 = vpop.permute.xlu0 %1226
        %v1228 = vlaneseq
        %v1229 = vshrl.u32 %v1228, 7
        %v1230 = vsub.s32 %v878, %v1229
        %v1231 = vrot.slane %v1227, %v1230
        %vm1233 = vcmask 57344
        %v1234 = vsel %vm1233, %v1231, 0.0
        %1235 = vadd.xlane.f32.xlu0 %v1234
        %v1236 = vpop.xlane.xlu0 %1235
        %v1237 = vrot.slane %v1236, 4
        %v1238 = vadd.f32 %v1236, %v1237
        %v1239 = vrot.slane %v1238, 2
        %v1240 = vadd.f32 %v1238, %v1239
        %v1241 = vrot.slane %v1240, 1
        %v1242 = vadd.f32 %v1240, %v1241
        %s1243 = vtos %v1242
        %v1244 = vmul.f32 %v1212, %v1221
        %1246 = vset.pattern.permute.xlu0 0
        %1247 = vperm.xlu0 %1246, %v1244
        %v1248 = vpop.permute.xlu0 %1247
        %v1249 = vlaneseq
        %v1250 = vshrl.u32 %v1249, 7
        %v1251 = vsub.s32 %v878, %v1250
        %v1252 = vrot.slane %v1248, %v1251
        %v1254 = vsel %vm1233, %v1252, 0.0
        %1255 = vadd.xlane.f32.xlu0 %v1254
        %v1256 = vpop.xlane.xlu0 %1255
        %v1257 = vrot.slane %v1256, 4
        %v1258 = vadd.f32 %v1256, %v1257
        %v1259 = vrot.slane %v1258, 2
        %v1260 = vadd.f32 %v1258, %v1259
        %v1261 = vrot.slane %v1260, 1
        %v1262 = vadd.f32 %v1260, %v1261
        %s1263 = vtos %v1262
        %1264 = vrot.lane.b32.xlu0 %v1217, 112
        %v1265 = vpop.permute.xlu0 %1264
        %v1267 = vsel %vm1233, %v1265, 0.0
        %1268 = vadd.xlane.f32.xlu0 %v1267
        %v1269 = vpop.xlane.xlu0 %1268
        %v1270 = vrot.slane %v1269, 4
        %v1271 = vadd.f32 %v1269, %v1270
        %v1272 = vrot.slane %v1271, 2
        %v1273 = vadd.f32 %v1271, %v1272
        %v1274 = vrot.slane %v1273, 1
        %v1275 = vadd.f32 %v1273, %v1274
        %s1276 = vtos %v1275
        %vm1277 = vcmp.eq.s32.totalorder %v876, 0
        %vm1278 = vcmp.eq.s32.totalorder %v878, 0
        %vm1279 = vmand %vm1277, %vm1278
        %v1280 = vstv %s1243
        %v1281 = vsel %vm1279, %v1280, 0.0
        %vm1282 = vcmp.eq.s32.totalorder %v878, 1
        %vm1283 = vmand %vm1277, %vm1282
        %v1284 = vstv %s1263
        %v1285 = vsel %vm1283, %v1284, 0.0
        %v1286 = vadd.f32 %v1281, %v1285
        %vm1287 = vcmp.eq.s32.totalorder %v878, 2
        %vm1288 = vmand %vm1277, %vm1287
        %v1289 = vstv %s1276
        %v1290 = vsel %vm1288, %v1289, 0.0
        %v1291 = vadd.f32 %v1286, %v1290
        %1292 = vst [vmem:[%s531] sm:$0xff] %v1291
        %s1293 = sand.u32 %s298, 1
        %s1294 = scalar_lea.sflag [#allocation5], %s1293
        %s1295 = sand.u32 %s298, 1
        %s1296 = smul.addr %s1295, 8
        %s1297 = scalar_lea.vmem [#allocation12], %s1296
        // Predicated region
        $region85: #{tpu_custom_call.1} parent=63 // pred_check
          %p1298 = pneg %p308
        $region86: #{tpu_custom_call.1} parent=63 // pred_check_branch
          %1300 = sbr.rel (%p1298) target = $region88
        $region87: #{tpu_custom_call.1} parent=63 // pred_region
          %s1302 = ssub.s32 128, 128
          %1303 = vsyncadd %s1294, %s1302
          %s1304 = smul.addr %s34, 128
          %s1305 = scalar_lea.hbm %s11, %s1304
          %s1307 = sshll.u32 %s1297, 4
          %s1308 = int_to_ptr.vmem [resolvable:$true] %s1307
          %1310 = dma.vmem_to_hbm [thread:$0]  %s1308, 128, %s1305, %s1294
        $region88: #{tpu_custom_call.1} parent=63 // pred_fallthru
          _
      $region64: #{tpu_custom_call.1} parent=5 // pred_fallthru
        _
      %p1311 = scmp.le.s32.totalorder 2, %s29
      // Predicated region
      $region89: #{tpu_custom_call.1} parent=5 // pred_check
        %p1312 = pneg %p1311
      $region90: #{tpu_custom_call.1} parent=5 // pred_check_branch
        %1314 = sbr.rel (%p1312) target = $region92
      $region91: #{tpu_custom_call.1} parent=5 // pred_region
        %s1315 = ssub.s32 %s29, 2
        // Predicated region
        $region93: #{tpu_custom_call.1} parent=91 // pred_check
          %p1316 = pneg %p314
        $region94: #{tpu_custom_call.1} parent=91 // pred_check_branch
          %1318 = sbr.rel (%p1316) target = $region96
        $region95: #{tpu_custom_call.1} parent=91 // pred_region
          %s1319 = sand.u32 %s299, 1
          %s1320 = scalar_lea.sflag [#allocation5], %s1319
          %s1321 = sand.u32 %s299, 1
          %s1322 = smul.addr %s1321, 8
          %s1323 = scalar_lea.vmem [#allocation12], %s1322
          %1324 = dma.done %s1320, 128
        $region96: #{tpu_custom_call.1} parent=91 // pred_fallthru
          _
      $region92: #{tpu_custom_call.1} parent=5 // pred_fallthru
        _
    $region6: #{tpu_custom_call.1} parent=1 // loop_footer
      %s33 = sadd.s32 1, %s29
    $region7: #{tpu_custom_call.1} parent=1 // loop_footer_branch
      %28 = sbr.rel target = $region3
    $region8: #{tpu_custom_call.1} parent=1 // loop_exit
      _
    %1325 = vsyncpa [#allocation4], 1
    %s1326 = scalar_lea.sflag [#allocation4], 1
    %1327 = vsyncpa %s1326, 1
    %1328 = vsyncpa [#allocation7], 1
    %s1329 = scalar_lea.sflag [#allocation7], 1
    %1330 = vsyncpa %s1329, 1
    %1331 = vsyncpa [#allocation10], 1
    %1332 = vsyncpa [#allocation5], 1
    %s1333 = scalar_lea.sflag [#allocation5], 1
    %1334 = vsyncpa %s1333, 1

</llo_original>
